<compile_context>
chip_gen: v7x
topology: tpu7x:2x2x1
jax: 0.10.0
libtpu: 0.0.40
codegen_flags: <defaults>
</compile_context>

<pallas_src>
import functools

import jax
import jax.numpy as jnp
from jax import lax
from jax.experimental import pallas as pl
from jax.experimental.pallas import tpu as pltpu


# -----------------------------------------------------------------------------
# Fused kernel: NB images per grid step, packed on the sublane axis.
#   EdgeKernel -> (crop=Identity) -> 1x1-conv backbone stand-in -> pooled MLP head
# -----------------------------------------------------------------------------
def fused_forward_kernel(x_ref, mask_ref, bx_ref, by_ref, wpw_ref, bpw_ref,
                         w1_ref, b1_ref, w2t_ref, b2_ref, o_ref, *, NB, C, H, W):
    HW = H * W
    R = NB * C

    x = x_ref[...]                                   # (NB*C, HW)  f32, spatial on lanes

    # Halo masks for the 3x3 "SAME" zero padding: shape-only constants, computed once in
    # the wrapper (hoisted out of the per-step body).  Broadcast each once and reuse.
    left_m = jnp.broadcast_to(mask_ref[0:1, :], (R, HW))    # (y, x-1) in-bounds
    right_m = jnp.broadcast_to(mask_ref[1:2, :], (R, HW))   # (y, x+1) in-bounds
    up_m = jnp.broadcast_to(mask_ref[2:3, :], (R, HW))      # (y-1, x) in-bounds
    down_m = jnp.broadcast_to(mask_ref[3:4, :], (R, HW))    # (y+1, x) in-bounds

    def tap(v, off, m):
        # result[r, p] = v[r, p + off] inside the image, 0 in the zero-padding halo.
        # (multiplicative f32 mask; the roll wraps within one flattened image row, and the
        #  wrapped lanes are exactly the masked-out halo lanes)
        return pltpu.roll(v, shift=(-off) % HW, axis=1) * m

    # ---- EdgeKernel: separable Sobel, Gx = [1,2,1]^T (x) [1,0,-1], Gy = Gx^T ----
    x_l = tap(x, -1, left_m)                         # in[y, x-1]
    x_r = tap(x, +1, right_m)                        # in[y, x+1]
    hdiff = x_l - x_r                                # horizontal [1, 0, -1]
    hsmth = x_l + 2.0 * x + x_r                      # horizontal [1, 2,  1]

    gx = tap(hdiff, -W, up_m) + 2.0 * hdiff + tap(hdiff, +W, down_m) + bx_ref[...]
    gy = tap(hsmth, -W, up_m) - tap(hsmth, +W, down_m) + by_ref[...]

    mag = jnp.sqrt(gx * gx + gy * gy)                # (NB*C, HW)
    # X / X.amax(dim=(2,3), keepdim=True)  (inf/NaN for an all-zero channel, same as PyTorch)
    mmax = jnp.max(mag, axis=1, keepdims=True)       # per-(image, channel) spatial max
    r = pl.reciprocal(mmax, approx=True)             # EUP slot
    r = r * (2.0 - mmax * r)                         # one Newton step -> ~full f32 accuracy
    mag = mag * r

    # crop = nn.Identity()  (crop_image=False default)

    # ---- backbone stand-in: 1x1 conv (C -> F) + ReLU, one image at a time so only a
    #      single (F, HW) feature map is ever live in VMEM; then AdaptiveAvgPool2d((1,1))
    #      + Flatten + Dropout(eval=Identity) + LazyLinear(128) + ReLU ----
    # TODO(synk): torch.hub.load('pytorch/vision', NAME).features cannot be reproduced
    #             in-script; replaced by this deterministic pointwise-conv feature extractor.
    wpw = wpw_ref[...]                               # (F, C)  conv weight (out, in)
    bpw = bpw_ref[...]                               # (F, 1)
    w1 = w1_ref[...]                                 # (F, HID)
    b1 = b1_ref[...]                                 # (1, HID)
    inv_hw = 1.0 / HW

    h_rows = []
    for n in range(NB):                              # static unroll; NB is small
        img = mag[n * C:(n + 1) * C, :]              # (C, HW)  one image
        acc = wpw[:, 0:1] * img[0:1, :]              # C unrolled VPU FMAs (outer products)
        for c in range(1, C):
            acc = acc + wpw[:, c:c + 1] * img[c:c + 1, :]
        feats = jnp.maximum(acc + bpw, 0.0)          # (F, HW)  only one live at a time
        pooled = jnp.sum(feats, axis=1, keepdims=True) * inv_hw          # (F, 1)
        h = jnp.sum(pooled * w1, axis=0, keepdims=True) + b1             # (1, HID)
        h_rows.append(jnp.maximum(h, 0.0))
    h_all = jnp.concatenate(h_rows, axis=0)          # (NB, HID)  lane-dense

    # ---- Linear(128, 2), batched across the NB images; lane-dense (NB, NCLS) store ----
    w2t = w2t_ref[...]                               # (NCLS, HID)
    NCLS = w2t.shape[0]
    cols = [jnp.sum(h_all * w2t[k:k + 1, :], axis=1, keepdims=True) for k in range(NCLS)]
    o_ref[...] = jnp.concatenate(cols, axis=1) + b2_ref[...]             # (NB, NCLS)


# -----------------------------------------------------------------------------
# Full ModelHubBase forward (filter -> crop=Identity -> model.features -> output)
# -----------------------------------------------------------------------------
def model_hub_forward(x, params, *, nb=8):
    B, C, H, W = x.shape
    HW = H * W
    F, HID = params["w1"].shape
    NCLS = params["w2"].shape[1]

    # Pick NB (images per grid step) so that NB*C rows is a multiple of 8 (sublane tile)
    # when the grid has > 1 step, and so that the grid has >= 2 steps (both v7x TCs busy).
    # Otherwise fall back to a single full-array step (no (8,128) divisibility constraint).
    if B % nb == 0 and B // nb >= 2 and (nb * C) % 8 == 0:
        NB = nb
    else:
        NB = B
    grid = B // NB

    # Batch packed onto sublanes: row = image*C + channel, spatial flattened on lanes.
    x_rows = x.reshape(B * C, HW)                    # contiguous -> free reshape

    # Shape-only halo masks for the 3x3 "SAME" zero padding, computed once (hoisted).
    p = jnp.arange(HW, dtype=jnp.int32)
    col = p % W
    masks = jnp.stack([
        col >= 1,                                    # (y, x-1) in-bounds
        col <= W - 2,                                # (y, x+1) in-bounds
        p >= W,                                      # (y-1, x) in-bounds
        p < (H - 1) * W,                             # (y+1, x) in-bounds
    ]).astype(jnp.float32)                           # (4, HW)

    # Per-row conv biases (one per (image, channel) row of the packed slab).
    bx = jnp.tile(params["bx"].reshape(C, 1), (NB, 1))      # (NB*C, 1)
    by = jnp.tile(params["by"].reshape(C, 1), (NB, 1))      # (NB*C, 1)
    wpw = params["w_pw"]                             # (F, C)
    bpw = params["b_pw"].reshape(F, 1)
    w1 = params["w1"]                                # (F, HID)
    b1 = params["b1"].reshape(1, HID)
    w2t = params["w2"].T                             # (NCLS, HID)  one-time tiny transpose
    b2 = params["b2"].reshape(1, NCLS)

    # Explicit VMEM budget (per-step working set): double-buffered input slab + hoisted
    # masks + weights + edge-stage temporaries (~12x slab) + one live (F, HW) feature map.
    # Clamp to a window that is safe on every generation (v7x: 64 MiB physical VMEM).
    slab_bytes = NB * C * HW * 4
    budget = (2 * slab_bytes + 12 * slab_bytes + F * HW * 4
              + (4 * HW + 2 * NB * C + F * C + F + F * HID + HID + HID * NCLS + NCLS) * 4)
    vmem_limit = int(min(max(2 * budget, 16 * 1024 * 1024), 48 * 1024 * 1024))

    out = pl.pallas_call(
        functools.partial(fused_forward_kernel, NB=NB, C=C, H=H, W=W),
        out_shape=jax.ShapeDtypeStruct((B, NCLS), jnp.float32),
        grid=(grid,),
        in_specs=[
            pl.BlockSpec((NB * C, HW), lambda b: (b, 0)),     # packed image slab (per step)
            pl.BlockSpec((4, HW), lambda b: (0, 0)),          # halo masks (resident)
            pl.BlockSpec((NB * C, 1), lambda b: (0, 0)),      # Gx conv bias per row
            pl.BlockSpec((NB * C, 1), lambda b: (0, 0)),      # Gy conv bias per row
            pl.BlockSpec((F, C), lambda b: (0, 0)),           # backbone 1x1 conv weight
            pl.BlockSpec((F, 1), lambda b: (0, 0)),           # backbone bias
            pl.BlockSpec((F, HID), lambda b: (0, 0)),         # LazyLinear(128) weight
            pl.BlockSpec((1, HID), lambda b: (0, 0)),         # LazyLinear(128) bias
            pl.BlockSpec((NCLS, HID), lambda b: (0, 0)),      # Linear(128, 2) weight^T
            pl.BlockSpec((1, NCLS), lambda b: (0, 0)),        # Linear(128, 2) bias
        ],
        out_specs=pl.BlockSpec((NB, NCLS), lambda b: (b, 0)), # lane-dense output slab
        compiler_params=pltpu.CompilerParams(
            dimension_semantics=("parallel",),                # batch axis -> both TCs on v7x
            vmem_limit_bytes=vmem_limit),
    )(x_rows, masks, bx, by, wpw, bpw, w1, b1, w2t, b2)
    return out


# -----------------------------------------------------------------------------
# Pure-JAX reference (numerical sanity check)
# -----------------------------------------------------------------------------
def ref_forward(x, params):
    B, C, H, W = x.shape
    Kx = jnp.array([[1., 0., -1.], [2., 0., -2.], [1., 0., -1.]], jnp.float32)
    idx = jnp.arange(C)
    wx = jnp.zeros((C, C, 3, 3), jnp.float32).at[idx, idx].set(Kx)
    wy = jnp.zeros((C, C, 3, 3), jnp.float32).at[idx, idx].set(Kx.T)
    gx = lax.conv_general_dilated(x, wx, (1, 1), "SAME") + params["bx"][None, :, None, None]
    gy = lax.conv_general_dilated(x, wy, (1, 1), "SAME") + params["by"][None, :, None, None]
    mag = jnp.sqrt(gx * gx + gy * gy)
    mag = mag / jnp.max(mag, axis=(2, 3), keepdims=True)
    feats = jnp.maximum(
        jnp.einsum("bchw,fc->bfhw", mag, params["w_pw"])
        + params["b_pw"][None, :, None, None], 0.0)
    pooled = jnp.mean(feats, axis=(2, 3))
    h = jnp.maximum(pooled @ params["w1"] + params["b1"], 0.0)
    return h @ params["w2"] + params["b2"]


if __name__ == "__main__":
    B, C, H, W = 16, 3, 16, 16      # EdgeKernel fixes C=3; B=16 -> grid of 2 steps (NB=8)
    F, HID = 32, 128                # synthetic backbone channels; LazyLinear(128)

    key = jax.random.PRNGKey(0)
    ks = jax.random.split(key, 8)
    params = {
        "bx": 0.1 * jax.random.normal(ks[0], (C,), jnp.float32),       # Gx conv bias
        "by": 0.1 * jax.random.normal(ks[1], (C,), jnp.float32),       # Gy conv bias
        "w_pw": 0.3 * jax.random.normal(ks[2], (F, C), jnp.float32),   # backbone 1x1 conv (out,in)
        "b_pw": 0.1 * jax.random.normal(ks[3], (F,), jnp.float32),
        "w1": 0.1 * jax.random.normal(ks[4], (F, HID), jnp.float32),   # LazyLinear(128)
        "b1": 0.1 * jax.random.normal(ks[5], (HID,), jnp.float32),
        "w2": 0.1 * jax.random.normal(ks[6], (HID, 2), jnp.float32),   # Linear(128, 2)
        "b2": 0.1 * jax.random.normal(ks[7], (2,), jnp.float32),
    }

    x = jax.random.normal(jax.random.PRNGKey(1), (B, C, H, W), jnp.float32)

    out = jax.block_until_ready(model_hub_forward(x, params))
    ref = jax.block_until_ready(ref_forward(x, params))

    assert out.shape == (B, 2), out.shape
    assert jnp.allclose(out, ref, rtol=1e-2, atol=1e-2), (out, ref)
    print("KERNEL_OK")
</pallas_src>

<mosaic_0001>
module attributes {stable_mosaic.version = 11 : i64} {
  func.func @fused_forward_kernel(%arg0: i32, %arg1: memref<24x256xf32, #tpu.memory_space<vmem>>, %arg2: memref<4x256xf32, #tpu.memory_space<vmem>>, %arg3: memref<24x1xf32, #tpu.memory_space<vmem>>, %arg4: memref<24x1xf32, #tpu.memory_space<vmem>>, %arg5: memref<32x3xf32, #tpu.memory_space<vmem>>, %arg6: memref<32x1xf32, #tpu.memory_space<vmem>>, %arg7: memref<32x128xf32, #tpu.memory_space<vmem>>, %arg8: memref<1x128xf32, #tpu.memory_space<vmem>>, %arg9: memref<2x128xf32, #tpu.memory_space<vmem>>, %arg10: memref<1x2xf32, #tpu.memory_space<vmem>>, %arg11: memref<8x2xf32, #tpu.memory_space<vmem>>) attributes {dimension_semantics = [#tpu.dimension_semantics<parallel>], iteration_bounds = array<i64: 2>, scalar_prefetch = 0 : i64, scratch_operands = 0 : i64, tpu.core_type = #tpu.core_type<tc>, window_params = [{transform_indices = @transform_0, window_bounds = array<i64: 24, 256>}, {pipeline_mode = #tpu.pipeline_mode<synchronous>, transform_indices = @transform_1, window_bounds = array<i64: 4, 256>}, {pipeline_mode = #tpu.pipeline_mode<synchronous>, transform_indices = @transform_2, window_bounds = array<i64: 24, 1>}, {pipeline_mode = #tpu.pipeline_mode<synchronous>, transform_indices = @transform_3, window_bounds = array<i64: 24, 1>}, {pipeline_mode = #tpu.pipeline_mode<synchronous>, transform_indices = @transform_4, window_bounds = array<i64: 32, 3>}, {pipeline_mode = #tpu.pipeline_mode<synchronous>, transform_indices = @transform_5, window_bounds = array<i64: 32, 1>}, {pipeline_mode = #tpu.pipeline_mode<synchronous>, transform_indices = @transform_6, window_bounds = array<i64: 32, 128>}, {pipeline_mode = #tpu.pipeline_mode<synchronous>, transform_indices = @transform_7, window_bounds = array<i64: 1, 128>}, {pipeline_mode = #tpu.pipeline_mode<synchronous>, transform_indices = @transform_8, window_bounds = array<i64: 2, 128>}, {pipeline_mode = #tpu.pipeline_mode<synchronous>, transform_indices = @transform_9, window_bounds = array<i64: 1, 2>}, {transform_indices = @transform_10, window_bounds = array<i64: 8, 2>}]} {
    %c0 = arith.constant 0 : index
    %c0_0 = arith.constant 0 : index
    %0 = vector.load %arg1[%c0, %c0_0] : memref<24x256xf32, #tpu.memory_space<vmem>>, vector<24x256xf32>
    %c0_1 = arith.constant 0 : index
    %c0_2 = arith.constant 0 : index
    %1 = vector.load %arg2[%c0_1, %c0_2] : memref<4x256xf32, #tpu.memory_space<vmem>>, vector<1x256xf32>
    %2 = vector.shape_cast %1 : vector<1x256xf32> to vector<1x256xf32>
    %3 = vector.broadcast %2 : vector<1x256xf32> to vector<24x256xf32>
    %c1 = arith.constant 1 : index
    %c0_3 = arith.constant 0 : index
    %4 = vector.load %arg2[%c1, %c0_3] : memref<4x256xf32, #tpu.memory_space<vmem>>, vector<1x256xf32>
    %5 = vector.shape_cast %4 : vector<1x256xf32> to vector<1x256xf32>
    %6 = vector.broadcast %5 : vector<1x256xf32> to vector<24x256xf32>
    %c2 = arith.constant 2 : index
    %c0_4 = arith.constant 0 : index
    %7 = vector.load %arg2[%c2, %c0_4] : memref<4x256xf32, #tpu.memory_space<vmem>>, vector<1x256xf32>
    %8 = vector.shape_cast %7 : vector<1x256xf32> to vector<1x256xf32>
    %9 = vector.broadcast %8 : vector<1x256xf32> to vector<24x256xf32>
    %c3 = arith.constant 3 : index
    %c0_5 = arith.constant 0 : index
    %10 = vector.load %arg2[%c3, %c0_5] : memref<4x256xf32, #tpu.memory_space<vmem>>, vector<1x256xf32>
    %11 = vector.shape_cast %10 : vector<1x256xf32> to vector<1x256xf32>
    %12 = vector.broadcast %11 : vector<1x256xf32> to vector<24x256xf32>
    %c1_i32 = arith.constant 1 : i32
    %13 = tpu.dynamic_rotate %0 by %c1_i32 dim 1 : vector<24x256xf32>, i32 -> vector<24x256xf32>
    %14 = arith.mulf %13, %3 : vector<24x256xf32>
    %c255_i32 = arith.constant 255 : i32
    %15 = tpu.dynamic_rotate %0 by %c255_i32 dim 1 : vector<24x256xf32>, i32 -> vector<24x256xf32>
    %16 = arith.mulf %15, %6 : vector<24x256xf32>
    %17 = arith.subf %14, %16 : vector<24x256xf32>
    %cst = arith.constant 2.000000e+00 : f32
    %18 = vector.broadcast %cst : f32 to vector<24x256xf32>
    %19 = arith.mulf %18, %0 : vector<24x256xf32>
    %20 = arith.addf %14, %19 : vector<24x256xf32>
    %21 = arith.addf %20, %16 : vector<24x256xf32>
    %c16_i32 = arith.constant 16 : i32
    %22 = tpu.dynamic_rotate %17 by %c16_i32 dim 1 : vector<24x256xf32>, i32 -> vector<24x256xf32>
    %23 = arith.mulf %22, %9 : vector<24x256xf32>
    %cst_6 = arith.constant 2.000000e+00 : f32
    %24 = vector.broadcast %cst_6 : f32 to vector<24x256xf32>
    %25 = arith.mulf %24, %17 : vector<24x256xf32>
    %26 = arith.addf %23, %25 : vector<24x256xf32>
    %c240_i32 = arith.constant 240 : i32
    %27 = tpu.dynamic_rotate %17 by %c240_i32 dim 1 : vector<24x256xf32>, i32 -> vector<24x256xf32>
    %28 = arith.mulf %27, %12 : vector<24x256xf32>
    %29 = arith.addf %26, %28 : vector<24x256xf32>
    %c0_7 = arith.constant 0 : index
    %c0_8 = arith.constant 0 : index
    %30 = vector.load %arg3[%c0_7, %c0_8] : memref<24x1xf32, #tpu.memory_space<vmem>>, vector<24x1xf32>
    %31 = vector.broadcast %30 : vector<24x1xf32> to vector<24x256xf32>
    %32 = arith.addf %29, %31 : vector<24x256xf32>
    %c16_i32_9 = arith.constant 16 : i32
    %33 = tpu.dynamic_rotate %21 by %c16_i32_9 dim 1 : vector<24x256xf32>, i32 -> vector<24x256xf32>
    %34 = arith.mulf %33, %9 : vector<24x256xf32>
    %c240_i32_10 = arith.constant 240 : i32
    %35 = tpu.dynamic_rotate %21 by %c240_i32_10 dim 1 : vector<24x256xf32>, i32 -> vector<24x256xf32>
    %36 = arith.mulf %35, %12 : vector<24x256xf32>
    %37 = arith.subf %34, %36 : vector<24x256xf32>
    %c0_11 = arith.constant 0 : index
    %c0_12 = arith.constant 0 : index
    %38 = vector.load %arg4[%c0_11, %c0_12] : memref<24x1xf32, #tpu.memory_space<vmem>>, vector<24x1xf32>
    %39 = vector.broadcast %38 : vector<24x1xf32> to vector<24x256xf32>
    %40 = arith.addf %37, %39 : vector<24x256xf32>
    %41 = arith.mulf %32, %32 : vector<24x256xf32>
    %42 = arith.mulf %40, %40 : vector<24x256xf32>
    %43 = arith.addf %41, %42 : vector<24x256xf32>
    %44 = math.sqrt %43 : vector<24x256xf32>
    %cst_13 = arith.constant dense<0xFF800000> : vector<24xf32>
    %45 = vector.multi_reduction <maximumf>, %44, %cst_13 [1] : vector<24x256xf32> to vector<24xf32>
    %46 = vector.shape_cast %45 : vector<24xf32> to vector<24x1xf32>
    %47 = tpu.reciprocal %46 {approx = true} : vector<24x1xf32> -> vector<24x1xf32>
    %48 = arith.mulf %46, %47 : vector<24x1xf32>
    %cst_14 = arith.constant 2.000000e+00 : f32
    %49 = vector.broadcast %cst_14 : f32 to vector<24x1xf32>
    %50 = arith.subf %49, %48 : vector<24x1xf32>
    %51 = arith.mulf %47, %50 : vector<24x1xf32>
    %52 = vector.broadcast %51 : vector<24x1xf32> to vector<24x256xf32>
    %53 = arith.mulf %44, %52 : vector<24x256xf32>
    %c0_15 = arith.constant 0 : index
    %c0_16 = arith.constant 0 : index
    %54 = vector.load %arg5[%c0_15, %c0_16] : memref<32x3xf32, #tpu.memory_space<vmem>>, vector<32x3xf32>
    %c0_17 = arith.constant 0 : index
    %c0_18 = arith.constant 0 : index
    %55 = vector.load %arg6[%c0_17, %c0_18] : memref<32x1xf32, #tpu.memory_space<vmem>>, vector<32x1xf32>
    %c0_19 = arith.constant 0 : index
    %c0_20 = arith.constant 0 : index
    %56 = vector.load %arg7[%c0_19, %c0_20] : memref<32x128xf32, #tpu.memory_space<vmem>>, vector<32x128xf32>
    %c0_21 = arith.constant 0 : index
    %c0_22 = arith.constant 0 : index
    %57 = vector.load %arg8[%c0_21, %c0_22] : memref<1x128xf32, #tpu.memory_space<vmem>>, vector<1x128xf32>
    %58 = vector.extract_strided_slice %53 {offsets = [0, 0], sizes = [3, 256], strides = [1, 1]} : vector<24x256xf32> to vector<3x256xf32>
    %59 = vector.extract_strided_slice %54 {offsets = [0, 0], sizes = [32, 1], strides = [1, 1]} : vector<32x3xf32> to vector<32x1xf32>
    %60 = vector.extract_strided_slice %58 {offsets = [0, 0], sizes = [1, 256], strides = [1, 1]} : vector<3x256xf32> to vector<1x256xf32>
    %61 = vector.broadcast %59 : vector<32x1xf32> to vector<32x256xf32>
    %62 = vector.broadcast %60 : vector<1x256xf32> to vector<32x256xf32>
    %63 = arith.mulf %61, %62 : vector<32x256xf32>
    %64 = vector.extract_strided_slice %54 {offsets = [0, 1], sizes = [32, 1], strides = [1, 1]} : vector<32x3xf32> to vector<32x1xf32>
    %65 = vector.extract_strided_slice %58 {offsets = [1, 0], sizes = [1, 256], strides = [1, 1]} : vector<3x256xf32> to vector<1x256xf32>
    %66 = vector.broadcast %64 : vector<32x1xf32> to vector<32x256xf32>
    %67 = vector.broadcast %65 : vector<1x256xf32> to vector<32x256xf32>
    %68 = arith.mulf %66, %67 : vector<32x256xf32>
    %69 = arith.addf %63, %68 : vector<32x256xf32>
    %70 = vector.extract_strided_slice %54 {offsets = [0, 2], sizes = [32, 1], strides = [1, 1]} : vector<32x3xf32> to vector<32x1xf32>
    %71 = vector.extract_strided_slice %58 {offsets = [2, 0], sizes = [1, 256], strides = [1, 1]} : vector<3x256xf32> to vector<1x256xf32>
    %72 = vector.broadcast %70 : vector<32x1xf32> to vector<32x256xf32>
    %73 = vector.broadcast %71 : vector<1x256xf32> to vector<32x256xf32>
    %74 = arith.mulf %72, %73 : vector<32x256xf32>
    %75 = arith.addf %69, %74 : vector<32x256xf32>
    %76 = vector.broadcast %55 : vector<32x1xf32> to vector<32x256xf32>
    %77 = arith.addf %75, %76 : vector<32x256xf32>
    %cst_23 = arith.constant 0.000000e+00 : f32
    %78 = vector.broadcast %cst_23 : f32 to vector<32x256xf32>
    %79 = arith.maximumf %77, %78 : vector<32x256xf32>
    %cst_24 = arith.constant dense<0.000000e+00> : vector<32xf32>
    %80 = vector.multi_reduction <add>, %79, %cst_24 [1] : vector<32x256xf32> to vector<32xf32>
    %81 = vector.shape_cast %80 : vector<32xf32> to vector<32x1xf32>
    %cst_25 = arith.constant 3.906250e-03 : f32
    %82 = vector.broadcast %cst_25 : f32 to vector<32x1xf32>
    %83 = arith.mulf %81, %82 : vector<32x1xf32>
    %84 = vector.broadcast %83 : vector<32x1xf32> to vector<32x128xf32>
    %85 = arith.mulf %84, %56 : vector<32x128xf32>
    %cst_26 = arith.constant dense<0.000000e+00> : vector<128xf32>
    %86 = vector.multi_reduction <add>, %85, %cst_26 [0] : vector<32x128xf32> to vector<128xf32>
    %87 = vector.shape_cast %86 : vector<128xf32> to vector<1x128xf32>
    %88 = arith.addf %87, %57 : vector<1x128xf32>
    %cst_27 = arith.constant 0.000000e+00 : f32
    %89 = vector.broadcast %cst_27 : f32 to vector<1x128xf32>
    %90 = arith.maximumf %88, %89 : vector<1x128xf32>
    %91 = vector.extract_strided_slice %53 {offsets = [3, 0], sizes = [3, 256], strides = [1, 1]} : vector<24x256xf32> to vector<3x256xf32>
    %92 = vector.extract_strided_slice %54 {offsets = [0, 0], sizes = [32, 1], strides = [1, 1]} : vector<32x3xf32> to vector<32x1xf32>
    %93 = vector.extract_strided_slice %91 {offsets = [0, 0], sizes = [1, 256], strides = [1, 1]} : vector<3x256xf32> to vector<1x256xf32>
    %94 = vector.broadcast %92 : vector<32x1xf32> to vector<32x256xf32>
    %95 = vector.broadcast %93 : vector<1x256xf32> to vector<32x256xf32>
    %96 = arith.mulf %94, %95 : vector<32x256xf32>
    %97 = vector.extract_strided_slice %54 {offsets = [0, 1], sizes = [32, 1], strides = [1, 1]} : vector<32x3xf32> to vector<32x1xf32>
    %98 = vector.extract_strided_slice %91 {offsets = [1, 0], sizes = [1, 256], strides = [1, 1]} : vector<3x256xf32> to vector<1x256xf32>
    %99 = vector.broadcast %97 : vector<32x1xf32> to vector<32x256xf32>
    %100 = vector.broadcast %98 : vector<1x256xf32> to vector<32x256xf32>
    %101 = arith.mulf %99, %100 : vector<32x256xf32>
    %102 = arith.addf %96, %101 : vector<32x256xf32>
    %103 = vector.extract_strided_slice %54 {offsets = [0, 2], sizes = [32, 1], strides = [1, 1]} : vector<32x3xf32> to vector<32x1xf32>
    %104 = vector.extract_strided_slice %91 {offsets = [2, 0], sizes = [1, 256], strides = [1, 1]} : vector<3x256xf32> to vector<1x256xf32>
    %105 = vector.broadcast %103 : vector<32x1xf32> to vector<32x256xf32>
    %106 = vector.broadcast %104 : vector<1x256xf32> to vector<32x256xf32>
    %107 = arith.mulf %105, %106 : vector<32x256xf32>
    %108 = arith.addf %102, %107 : vector<32x256xf32>
    %109 = vector.broadcast %55 : vector<32x1xf32> to vector<32x256xf32>
    %110 = arith.addf %108, %109 : vector<32x256xf32>
    %cst_28 = arith.constant 0.000000e+00 : f32
    %111 = vector.broadcast %cst_28 : f32 to vector<32x256xf32>
    %112 = arith.maximumf %110, %111 : vector<32x256xf32>
    %cst_29 = arith.constant dense<0.000000e+00> : vector<32xf32>
    %113 = vector.multi_reduction <add>, %112, %cst_29 [1] : vector<32x256xf32> to vector<32xf32>
    %114 = vector.shape_cast %113 : vector<32xf32> to vector<32x1xf32>
    %cst_30 = arith.constant 3.906250e-03 : f32
    %115 = vector.broadcast %cst_30 : f32 to vector<32x1xf32>
    %116 = arith.mulf %114, %115 : vector<32x1xf32>
    %117 = vector.broadcast %116 : vector<32x1xf32> to vector<32x128xf32>
    %118 = arith.mulf %117, %56 : vector<32x128xf32>
    %cst_31 = arith.constant dense<0.000000e+00> : vector<128xf32>
    %119 = vector.multi_reduction <add>, %118, %cst_31 [0] : vector<32x128xf32> to vector<128xf32>
    %120 = vector.shape_cast %119 : vector<128xf32> to vector<1x128xf32>
    %121 = arith.addf %120, %57 : vector<1x128xf32>
    %cst_32 = arith.constant 0.000000e+00 : f32
    %122 = vector.broadcast %cst_32 : f32 to vector<1x128xf32>
    %123 = arith.maximumf %121, %122 : vector<1x128xf32>
    %124 = vector.extract_strided_slice %53 {offsets = [6, 0], sizes = [3, 256], strides = [1, 1]} : vector<24x256xf32> to vector<3x256xf32>
    %125 = vector.extract_strided_slice %54 {offsets = [0, 0], sizes = [32, 1], strides = [1, 1]} : vector<32x3xf32> to vector<32x1xf32>
    %126 = vector.extract_strided_slice %124 {offsets = [0, 0], sizes = [1, 256], strides = [1, 1]} : vector<3x256xf32> to vector<1x256xf32>
    %127 = vector.broadcast %125 : vector<32x1xf32> to vector<32x256xf32>
    %128 = vector.broadcast %126 : vector<1x256xf32> to vector<32x256xf32>
    %129 = arith.mulf %127, %128 : vector<32x256xf32>
    %130 = vector.extract_strided_slice %54 {offsets = [0, 1], sizes = [32, 1], strides = [1, 1]} : vector<32x3xf32> to vector<32x1xf32>
    %131 = vector.extract_strided_slice %124 {offsets = [1, 0], sizes = [1, 256], strides = [1, 1]} : vector<3x256xf32> to vector<1x256xf32>
    %132 = vector.broadcast %130 : vector<32x1xf32> to vector<32x256xf32>
    %133 = vector.broadcast %131 : vector<1x256xf32> to vector<32x256xf32>
    %134 = arith.mulf %132, %133 : vector<32x256xf32>
    %135 = arith.addf %129, %134 : vector<32x256xf32>
    %136 = vector.extract_strided_slice %54 {offsets = [0, 2], sizes = [32, 1], strides = [1, 1]} : vector<32x3xf32> to vector<32x1xf32>
    %137 = vector.extract_strided_slice %124 {offsets = [2, 0], sizes = [1, 256], strides = [1, 1]} : vector<3x256xf32> to vector<1x256xf32>
    %138 = vector.broadcast %136 : vector<32x1xf32> to vector<32x256xf32>
    %139 = vector.broadcast %137 : vector<1x256xf32> to vector<32x256xf32>
    %140 = arith.mulf %138, %139 : vector<32x256xf32>
    %141 = arith.addf %135, %140 : vector<32x256xf32>
    %142 = vector.broadcast %55 : vector<32x1xf32> to vector<32x256xf32>
    %143 = arith.addf %141, %142 : vector<32x256xf32>
    %cst_33 = arith.constant 0.000000e+00 : f32
    %144 = vector.broadcast %cst_33 : f32 to vector<32x256xf32>
    %145 = arith.maximumf %143, %144 : vector<32x256xf32>
    %cst_34 = arith.constant dense<0.000000e+00> : vector<32xf32>
    %146 = vector.multi_reduction <add>, %145, %cst_34 [1] : vector<32x256xf32> to vector<32xf32>
    %147 = vector.shape_cast %146 : vector<32xf32> to vector<32x1xf32>
    %cst_35 = arith.constant 3.906250e-03 : f32
    %148 = vector.broadcast %cst_35 : f32 to vector<32x1xf32>
    %149 = arith.mulf %147, %148 : vector<32x1xf32>
    %150 = vector.broadcast %149 : vector<32x1xf32> to vector<32x128xf32>
    %151 = arith.mulf %150, %56 : vector<32x128xf32>
    %cst_36 = arith.constant dense<0.000000e+00> : vector<128xf32>
    %152 = vector.multi_reduction <add>, %151, %cst_36 [0] : vector<32x128xf32> to vector<128xf32>
    %153 = vector.shape_cast %152 : vector<128xf32> to vector<1x128xf32>
    %154 = arith.addf %153, %57 : vector<1x128xf32>
    %cst_37 = arith.constant 0.000000e+00 : f32
    %155 = vector.broadcast %cst_37 : f32 to vector<1x128xf32>
    %156 = arith.maximumf %154, %155 : vector<1x128xf32>
    %157 = vector.extract_strided_slice %53 {offsets = [9, 0], sizes = [3, 256], strides = [1, 1]} : vector<24x256xf32> to vector<3x256xf32>
    %158 = vector.extract_strided_slice %54 {offsets = [0, 0], sizes = [32, 1], strides = [1, 1]} : vector<32x3xf32> to vector<32x1xf32>
    %159 = vector.extract_strided_slice %157 {offsets = [0, 0], sizes = [1, 256], strides = [1, 1]} : vector<3x256xf32> to vector<1x256xf32>
    %160 = vector.broadcast %158 : vector<32x1xf32> to vector<32x256xf32>
    %161 = vector.broadcast %159 : vector<1x256xf32> to vector<32x256xf32>
    %162 = arith.mulf %160, %161 : vector<32x256xf32>
    %163 = vector.extract_strided_slice %54 {offsets = [0, 1], sizes = [32, 1], strides = [1, 1]} : vector<32x3xf32> to vector<32x1xf32>
    %164 = vector.extract_strided_slice %157 {offsets = [1, 0], sizes = [1, 256], strides = [1, 1]} : vector<3x256xf32> to vector<1x256xf32>
    %165 = vector.broadcast %163 : vector<32x1xf32> to vector<32x256xf32>
    %166 = vector.broadcast %164 : vector<1x256xf32> to vector<32x256xf32>
    %167 = arith.mulf %165, %166 : vector<32x256xf32>
    %168 = arith.addf %162, %167 : vector<32x256xf32>
    %169 = vector.extract_strided_slice %54 {offsets = [0, 2], sizes = [32, 1], strides = [1, 1]} : vector<32x3xf32> to vector<32x1xf32>
    %170 = vector.extract_strided_slice %157 {offsets = [2, 0], sizes = [1, 256], strides = [1, 1]} : vector<3x256xf32> to vector<1x256xf32>
    %171 = vector.broadcast %169 : vector<32x1xf32> to vector<32x256xf32>
    %172 = vector.broadcast %170 : vector<1x256xf32> to vector<32x256xf32>
    %173 = arith.mulf %171, %172 : vector<32x256xf32>
    %174 = arith.addf %168, %173 : vector<32x256xf32>
    %175 = vector.broadcast %55 : vector<32x1xf32> to vector<32x256xf32>
    %176 = arith.addf %174, %175 : vector<32x256xf32>
    %cst_38 = arith.constant 0.000000e+00 : f32
    %177 = vector.broadcast %cst_38 : f32 to vector<32x256xf32>
    %178 = arith.maximumf %176, %177 : vector<32x256xf32>
    %cst_39 = arith.constant dense<0.000000e+00> : vector<32xf32>
    %179 = vector.multi_reduction <add>, %178, %cst_39 [1] : vector<32x256xf32> to vector<32xf32>
    %180 = vector.shape_cast %179 : vector<32xf32> to vector<32x1xf32>
    %cst_40 = arith.constant 3.906250e-03 : f32
    %181 = vector.broadcast %cst_40 : f32 to vector<32x1xf32>
    %182 = arith.mulf %180, %181 : vector<32x1xf32>
    %183 = vector.broadcast %182 : vector<32x1xf32> to vector<32x128xf32>
    %184 = arith.mulf %183, %56 : vector<32x128xf32>
    %cst_41 = arith.constant dense<0.000000e+00> : vector<128xf32>
    %185 = vector.multi_reduction <add>, %184, %cst_41 [0] : vector<32x128xf32> to vector<128xf32>
    %186 = vector.shape_cast %185 : vector<128xf32> to vector<1x128xf32>
    %187 = arith.addf %186, %57 : vector<1x128xf32>
    %cst_42 = arith.constant 0.000000e+00 : f32
    %188 = vector.broadcast %cst_42 : f32 to vector<1x128xf32>
    %189 = arith.maximumf %187, %188 : vector<1x128xf32>
    %190 = vector.extract_strided_slice %53 {offsets = [12, 0], sizes = [3, 256], strides = [1, 1]} : vector<24x256xf32> to vector<3x256xf32>
    %191 = vector.extract_strided_slice %54 {offsets = [0, 0], sizes = [32, 1], strides = [1, 1]} : vector<32x3xf32> to vector<32x1xf32>
    %192 = vector.extract_strided_slice %190 {offsets = [0, 0], sizes = [1, 256], strides = [1, 1]} : vector<3x256xf32> to vector<1x256xf32>
    %193 = vector.broadcast %191 : vector<32x1xf32> to vector<32x256xf32>
    %194 = vector.broadcast %192 : vector<1x256xf32> to vector<32x256xf32>
    %195 = arith.mulf %193, %194 : vector<32x256xf32>
    %196 = vector.extract_strided_slice %54 {offsets = [0, 1], sizes = [32, 1], strides = [1, 1]} : vector<32x3xf32> to vector<32x1xf32>
    %197 = vector.extract_strided_slice %190 {offsets = [1, 0], sizes = [1, 256], strides = [1, 1]} : vector<3x256xf32> to vector<1x256xf32>
    %198 = vector.broadcast %196 : vector<32x1xf32> to vector<32x256xf32>
    %199 = vector.broadcast %197 : vector<1x256xf32> to vector<32x256xf32>
    %200 = arith.mulf %198, %199 : vector<32x256xf32>
    %201 = arith.addf %195, %200 : vector<32x256xf32>
    %202 = vector.extract_strided_slice %54 {offsets = [0, 2], sizes = [32, 1], strides = [1, 1]} : vector<32x3xf32> to vector<32x1xf32>
    %203 = vector.extract_strided_slice %190 {offsets = [2, 0], sizes = [1, 256], strides = [1, 1]} : vector<3x256xf32> to vector<1x256xf32>
    %204 = vector.broadcast %202 : vector<32x1xf32> to vector<32x256xf32>
    %205 = vector.broadcast %203 : vector<1x256xf32> to vector<32x256xf32>
    %206 = arith.mulf %204, %205 : vector<32x256xf32>
    %207 = arith.addf %201, %206 : vector<32x256xf32>
    %208 = vector.broadcast %55 : vector<32x1xf32> to vector<32x256xf32>
    %209 = arith.addf %207, %208 : vector<32x256xf32>
    %cst_43 = arith.constant 0.000000e+00 : f32
    %210 = vector.broadcast %cst_43 : f32 to vector<32x256xf32>
    %211 = arith.maximumf %209, %210 : vector<32x256xf32>
    %cst_44 = arith.constant dense<0.000000e+00> : vector<32xf32>
    %212 = vector.multi_reduction <add>, %211, %cst_44 [1] : vector<32x256xf32> to vector<32xf32>
    %213 = vector.shape_cast %212 : vector<32xf32> to vector<32x1xf32>
    %cst_45 = arith.constant 3.906250e-03 : f32
    %214 = vector.broadcast %cst_45 : f32 to vector<32x1xf32>
    %215 = arith.mulf %213, %214 : vector<32x1xf32>
    %216 = vector.broadcast %215 : vector<32x1xf32> to vector<32x128xf32>
    %217 = arith.mulf %216, %56 : vector<32x128xf32>
    %cst_46 = arith.constant dense<0.000000e+00> : vector<128xf32>
    %218 = vector.multi_reduction <add>, %217, %cst_46 [0] : vector<32x128xf32> to vector<128xf32>
    %219 = vector.shape_cast %218 : vector<128xf32> to vector<1x128xf32>
    %220 = arith.addf %219, %57 : vector<1x128xf32>
    %cst_47 = arith.constant 0.000000e+00 : f32
    %221 = vector.broadcast %cst_47 : f32 to vector<1x128xf32>
    %222 = arith.maximumf %220, %221 : vector<1x128xf32>
    %223 = vector.extract_strided_slice %53 {offsets = [15, 0], sizes = [3, 256], strides = [1, 1]} : vector<24x256xf32> to vector<3x256xf32>
    %224 = vector.extract_strided_slice %54 {offsets = [0, 0], sizes = [32, 1], strides = [1, 1]} : vector<32x3xf32> to vector<32x1xf32>
    %225 = vector.extract_strided_slice %223 {offsets = [0, 0], sizes = [1, 256], strides = [1, 1]} : vector<3x256xf32> to vector<1x256xf32>
    %226 = vector.broadcast %224 : vector<32x1xf32> to vector<32x256xf32>
    %227 = vector.broadcast %225 : vector<1x256xf32> to vector<32x256xf32>
    %228 = arith.mulf %226, %227 : vector<32x256xf32>
    %229 = vector.extract_strided_slice %54 {offsets = [0, 1], sizes = [32, 1], strides = [1, 1]} : vector<32x3xf32> to vector<32x1xf32>
    %230 = vector.extract_strided_slice %223 {offsets = [1, 0], sizes = [1, 256], strides = [1, 1]} : vector<3x256xf32> to vector<1x256xf32>
    %231 = vector.broadcast %229 : vector<32x1xf32> to vector<32x256xf32>
    %232 = vector.broadcast %230 : vector<1x256xf32> to vector<32x256xf32>
    %233 = arith.mulf %231, %232 : vector<32x256xf32>
    %234 = arith.addf %228, %233 : vector<32x256xf32>
    %235 = vector.extract_strided_slice %54 {offsets = [0, 2], sizes = [32, 1], strides = [1, 1]} : vector<32x3xf32> to vector<32x1xf32>
    %236 = vector.extract_strided_slice %223 {offsets = [2, 0], sizes = [1, 256], strides = [1, 1]} : vector<3x256xf32> to vector<1x256xf32>
    %237 = vector.broadcast %235 : vector<32x1xf32> to vector<32x256xf32>
    %238 = vector.broadcast %236 : vector<1x256xf32> to vector<32x256xf32>
    %239 = arith.mulf %237, %238 : vector<32x256xf32>
    %240 = arith.addf %234, %239 : vector<32x256xf32>
    %241 = vector.broadcast %55 : vector<32x1xf32> to vector<32x256xf32>
    %242 = arith.addf %240, %241 : vector<32x256xf32>
    %cst_48 = arith.constant 0.000000e+00 : f32
    %243 = vector.broadcast %cst_48 : f32 to vector<32x256xf32>
    %244 = arith.maximumf %242, %243 : vector<32x256xf32>
    %cst_49 = arith.constant dense<0.000000e+00> : vector<32xf32>
    %245 = vector.multi_reduction <add>, %244, %cst_49 [1] : vector<32x256xf32> to vector<32xf32>
    %246 = vector.shape_cast %245 : vector<32xf32> to vector<32x1xf32>
    %cst_50 = arith.constant 3.906250e-03 : f32
    %247 = vector.broadcast %cst_50 : f32 to vector<32x1xf32>
    %248 = arith.mulf %246, %247 : vector<32x1xf32>
    %249 = vector.broadcast %248 : vector<32x1xf32> to vector<32x128xf32>
    %250 = arith.mulf %249, %56 : vector<32x128xf32>
    %cst_51 = arith.constant dense<0.000000e+00> : vector<128xf32>
    %251 = vector.multi_reduction <add>, %250, %cst_51 [0] : vector<32x128xf32> to vector<128xf32>
    %252 = vector.shape_cast %251 : vector<128xf32> to vector<1x128xf32>
    %253 = arith.addf %252, %57 : vector<1x128xf32>
    %cst_52 = arith.constant 0.000000e+00 : f32
    %254 = vector.broadcast %cst_52 : f32 to vector<1x128xf32>
    %255 = arith.maximumf %253, %254 : vector<1x128xf32>
    %256 = vector.extract_strided_slice %53 {offsets = [18, 0], sizes = [3, 256], strides = [1, 1]} : vector<24x256xf32> to vector<3x256xf32>
    %257 = vector.extract_strided_slice %54 {offsets = [0, 0], sizes = [32, 1], strides = [1, 1]} : vector<32x3xf32> to vector<32x1xf32>
    %258 = vector.extract_strided_slice %256 {offsets = [0, 0], sizes = [1, 256], strides = [1, 1]} : vector<3x256xf32> to vector<1x256xf32>
    %259 = vector.broadcast %257 : vector<32x1xf32> to vector<32x256xf32>
    %260 = vector.broadcast %258 : vector<1x256xf32> to vector<32x256xf32>
    %261 = arith.mulf %259, %260 : vector<32x256xf32>
    %262 = vector.extract_strided_slice %54 {offsets = [0, 1], sizes = [32, 1], strides = [1, 1]} : vector<32x3xf32> to vector<32x1xf32>
    %263 = vector.extract_strided_slice %256 {offsets = [1, 0], sizes = [1, 256], strides = [1, 1]} : vector<3x256xf32> to vector<1x256xf32>
    %264 = vector.broadcast %262 : vector<32x1xf32> to vector<32x256xf32>
    %265 = vector.broadcast %263 : vector<1x256xf32> to vector<32x256xf32>
    %266 = arith.mulf %264, %265 : vector<32x256xf32>
    %267 = arith.addf %261, %266 : vector<32x256xf32>
    %268 = vector.extract_strided_slice %54 {offsets = [0, 2], sizes = [32, 1], strides = [1, 1]} : vector<32x3xf32> to vector<32x1xf32>
    %269 = vector.extract_strided_slice %256 {offsets = [2, 0], sizes = [1, 256], strides = [1, 1]} : vector<3x256xf32> to vector<1x256xf32>
    %270 = vector.broadcast %268 : vector<32x1xf32> to vector<32x256xf32>
    %271 = vector.broadcast %269 : vector<1x256xf32> to vector<32x256xf32>
    %272 = arith.mulf %270, %271 : vector<32x256xf32>
    %273 = arith.addf %267, %272 : vector<32x256xf32>
    %274 = vector.broadcast %55 : vector<32x1xf32> to vector<32x256xf32>
    %275 = arith.addf %273, %274 : vector<32x256xf32>
    %cst_53 = arith.constant 0.000000e+00 : f32
    %276 = vector.broadcast %cst_53 : f32 to vector<32x256xf32>
    %277 = arith.maximumf %275, %276 : vector<32x256xf32>
    %cst_54 = arith.constant dense<0.000000e+00> : vector<32xf32>
    %278 = vector.multi_reduction <add>, %277, %cst_54 [1] : vector<32x256xf32> to vector<32xf32>
    %279 = vector.shape_cast %278 : vector<32xf32> to vector<32x1xf32>
    %cst_55 = arith.constant 3.906250e-03 : f32
    %280 = vector.broadcast %cst_55 : f32 to vector<32x1xf32>
    %281 = arith.mulf %279, %280 : vector<32x1xf32>
    %282 = vector.broadcast %281 : vector<32x1xf32> to vector<32x128xf32>
    %283 = arith.mulf %282, %56 : vector<32x128xf32>
    %cst_56 = arith.constant dense<0.000000e+00> : vector<128xf32>
    %284 = vector.multi_reduction <add>, %283, %cst_56 [0] : vector<32x128xf32> to vector<128xf32>
    %285 = vector.shape_cast %284 : vector<128xf32> to vector<1x128xf32>
    %286 = arith.addf %285, %57 : vector<1x128xf32>
    %cst_57 = arith.constant 0.000000e+00 : f32
    %287 = vector.broadcast %cst_57 : f32 to vector<1x128xf32>
    %288 = arith.maximumf %286, %287 : vector<1x128xf32>
    %289 = vector.extract_strided_slice %53 {offsets = [21, 0], sizes = [3, 256], strides = [1, 1]} : vector<24x256xf32> to vector<3x256xf32>
    %290 = vector.extract_strided_slice %54 {offsets = [0, 0], sizes = [32, 1], strides = [1, 1]} : vector<32x3xf32> to vector<32x1xf32>
    %291 = vector.extract_strided_slice %289 {offsets = [0, 0], sizes = [1, 256], strides = [1, 1]} : vector<3x256xf32> to vector<1x256xf32>
    %292 = vector.broadcast %290 : vector<32x1xf32> to vector<32x256xf32>
    %293 = vector.broadcast %291 : vector<1x256xf32> to vector<32x256xf32>
    %294 = arith.mulf %292, %293 : vector<32x256xf32>
    %295 = vector.extract_strided_slice %54 {offsets = [0, 1], sizes = [32, 1], strides = [1, 1]} : vector<32x3xf32> to vector<32x1xf32>
    %296 = vector.extract_strided_slice %289 {offsets = [1, 0], sizes = [1, 256], strides = [1, 1]} : vector<3x256xf32> to vector<1x256xf32>
    %297 = vector.broadcast %295 : vector<32x1xf32> to vector<32x256xf32>
    %298 = vector.broadcast %296 : vector<1x256xf32> to vector<32x256xf32>
    %299 = arith.mulf %297, %298 : vector<32x256xf32>
    %300 = arith.addf %294, %299 : vector<32x256xf32>
    %301 = vector.extract_strided_slice %54 {offsets = [0, 2], sizes = [32, 1], strides = [1, 1]} : vector<32x3xf32> to vector<32x1xf32>
    %302 = vector.extract_strided_slice %289 {offsets = [2, 0], sizes = [1, 256], strides = [1, 1]} : vector<3x256xf32> to vector<1x256xf32>
    %303 = vector.broadcast %301 : vector<32x1xf32> to vector<32x256xf32>
    %304 = vector.broadcast %302 : vector<1x256xf32> to vector<32x256xf32>
    %305 = arith.mulf %303, %304 : vector<32x256xf32>
    %306 = arith.addf %300, %305 : vector<32x256xf32>
    %307 = vector.broadcast %55 : vector<32x1xf32> to vector<32x256xf32>
    %308 = arith.addf %306, %307 : vector<32x256xf32>
    %cst_58 = arith.constant 0.000000e+00 : f32
    %309 = vector.broadcast %cst_58 : f32 to vector<32x256xf32>
    %310 = arith.maximumf %308, %309 : vector<32x256xf32>
    %cst_59 = arith.constant dense<0.000000e+00> : vector<32xf32>
    %311 = vector.multi_reduction <add>, %310, %cst_59 [1] : vector<32x256xf32> to vector<32xf32>
    %312 = vector.shape_cast %311 : vector<32xf32> to vector<32x1xf32>
    %cst_60 = arith.constant 3.906250e-03 : f32
    %313 = vector.broadcast %cst_60 : f32 to vector<32x1xf32>
    %314 = arith.mulf %312, %313 : vector<32x1xf32>
    %315 = vector.broadcast %314 : vector<32x1xf32> to vector<32x128xf32>
    %316 = arith.mulf %315, %56 : vector<32x128xf32>
    %cst_61 = arith.constant dense<0.000000e+00> : vector<128xf32>
    %317 = vector.multi_reduction <add>, %316, %cst_61 [0] : vector<32x128xf32> to vector<128xf32>
    %318 = vector.shape_cast %317 : vector<128xf32> to vector<1x128xf32>
    %319 = arith.addf %318, %57 : vector<1x128xf32>
    %cst_62 = arith.constant 0.000000e+00 : f32
    %320 = vector.broadcast %cst_62 : f32 to vector<1x128xf32>
    %321 = arith.maximumf %319, %320 : vector<1x128xf32>
    %322 = tpu.concatenate %90, %123, %156, %189, %222, %255, %288, %321 in 0 : vector<1x128xf32>, vector<1x128xf32>, vector<1x128xf32>, vector<1x128xf32>, vector<1x128xf32>, vector<1x128xf32>, vector<1x128xf32>, vector<1x128xf32> -> vector<8x128xf32>
    %c0_63 = arith.constant 0 : index
    %c0_64 = arith.constant 0 : index
    %323 = vector.load %arg9[%c0_63, %c0_64] : memref<2x128xf32, #tpu.memory_space<vmem>>, vector<2x128xf32>
    %324 = vector.extract_strided_slice %323 {offsets = [0, 0], sizes = [1, 128], strides = [1, 1]} : vector<2x128xf32> to vector<1x128xf32>
    %325 = vector.broadcast %324 : vector<1x128xf32> to vector<8x128xf32>
    %326 = arith.mulf %322, %325 : vector<8x128xf32>
    %cst_65 = arith.constant dense<0.000000e+00> : vector<8xf32>
    %327 = vector.multi_reduction <add>, %326, %cst_65 [1] : vector<8x128xf32> to vector<8xf32>
    %328 = vector.shape_cast %327 : vector<8xf32> to vector<8x1xf32>
    %329 = vector.extract_strided_slice %323 {offsets = [1, 0], sizes = [1, 128], strides = [1, 1]} : vector<2x128xf32> to vector<1x128xf32>
    %330 = vector.broadcast %329 : vector<1x128xf32> to vector<8x128xf32>
    %331 = arith.mulf %322, %330 : vector<8x128xf32>
    %cst_66 = arith.constant dense<0.000000e+00> : vector<8xf32>
    %332 = vector.multi_reduction <add>, %331, %cst_66 [1] : vector<8x128xf32> to vector<8xf32>
    %333 = vector.shape_cast %332 : vector<8xf32> to vector<8x1xf32>
    %334 = tpu.concatenate %328, %333 in 1 : vector<8x1xf32>, vector<8x1xf32> -> vector<8x2xf32>
    %c0_67 = arith.constant 0 : index
    %c0_68 = arith.constant 0 : index
    %335 = vector.load %arg10[%c0_67, %c0_68] : memref<1x2xf32, #tpu.memory_space<vmem>>, vector<1x2xf32>
    %336 = vector.broadcast %335 : vector<1x2xf32> to vector<8x2xf32>
    %337 = arith.addf %334, %336 : vector<8x2xf32>
    %c0_69 = arith.constant 0 : index
    %c0_70 = arith.constant 0 : index
    %338 = vector.load %arg11[%c0_69, %c0_70] : memref<8x2xf32, #tpu.memory_space<vmem>>, vector<8x2xf32>
    tpu.vector_store %arg11[%c0_69, %c0_70], %337 {strides = array<i32>} : memref<8x2xf32, #tpu.memory_space<vmem>>, vector<8x2xf32>,
    return
  }
  func.func @transform_0(%arg0: i32) -> (i32, i32) {
    %c0_i32 = arith.constant 0 : i32
    %c0_i32_0 = arith.constant 0 : i32
    return %arg0, %c0_i32 : i32, i32
  }
  func.func @transform_1(%arg0: i32) -> (i32, i32) {
    %c0_i32 = arith.constant 0 : i32
    %c0_i32_0 = arith.constant 0 : i32
    %c0_i32_1 = arith.constant 0 : i32
    return %c0_i32, %c0_i32_0 : i32, i32
  }
  func.func @transform_2(%arg0: i32) -> (i32, i32) {
    %c0_i32 = arith.constant 0 : i32
    %c0_i32_0 = arith.constant 0 : i32
    %c0_i32_1 = arith.constant 0 : i32
    return %c0_i32, %c0_i32_0 : i32, i32
  }
  func.func @transform_3(%arg0: i32) -> (i32, i32) {
    %c0_i32 = arith.constant 0 : i32
    %c0_i32_0 = arith.constant 0 : i32
    %c0_i32_1 = arith.constant 0 : i32
    return %c0_i32, %c0_i32_0 : i32, i32
  }
  func.func @transform_4(%arg0: i32) -> (i32, i32) {
    %c0_i32 = arith.constant 0 : i32
    %c0_i32_0 = arith.constant 0 : i32
    %c0_i32_1 = arith.constant 0 : i32
    return %c0_i32, %c0_i32_0 : i32, i32
  }
  func.func @transform_5(%arg0: i32) -> (i32, i32) {
    %c0_i32 = arith.constant 0 : i32
    %c0_i32_0 = arith.constant 0 : i32
    %c0_i32_1 = arith.constant 0 : i32
    return %c0_i32, %c0_i32_0 : i32, i32
  }
  func.func @transform_6(%arg0: i32) -> (i32, i32) {
    %c0_i32 = arith.constant 0 : i32
    %c0_i32_0 = arith.constant 0 : i32
    %c0_i32_1 = arith.constant 0 : i32
    return %c0_i32, %c0_i32_0 : i32, i32
  }
  func.func @transform_7(%arg0: i32) -> (i32, i32) {
    %c0_i32 = arith.constant 0 : i32
    %c0_i32_0 = arith.constant 0 : i32
    %c0_i32_1 = arith.constant 0 : i32
    return %c0_i32, %c0_i32_0 : i32, i32
  }
  func.func @transform_8(%arg0: i32) -> (i32, i32) {
    %c0_i32 = arith.constant 0 : i32
    %c0_i32_0 = arith.constant 0 : i32
    %c0_i32_1 = arith.constant 0 : i32
    return %c0_i32, %c0_i32_0 : i32, i32
  }
  func.func @transform_9(%arg0: i32) -> (i32, i32) {
    %c0_i32 = arith.constant 0 : i32
    %c0_i32_0 = arith.constant 0 : i32
    %c0_i32_1 = arith.constant 0 : i32
    return %c0_i32, %c0_i32_0 : i32, i32
  }
  func.func @transform_10(%arg0: i32) -> (i32, i32) {
    %c0_i32 = arith.constant 0 : i32
    %c0_i32_0 = arith.constant 0 : i32
    return %arg0, %c0_i32 : i32, i32
  }
}

</mosaic_0001>

<llo_original>
// kernel: tpu_custom_call.1
$region0: #{tpu_custom_call.1}
  #allocation0 [shape = 'u32[]', space=smem, size = 0x4, offset = 0x4, fixed_abs, tag = 'smem constant byte address 0x4 - core index']
  #allocation1 [shape = 'u32[144,128]{1,0:T(1,128)}', space=vmem, size = 0x12000, scoped, tag = 'internal scratch']
  %s0 = inlined_call_operand.vmem [shape: f32[48,256], index: 0, kind: input, shape index: {}]
  %s1 = inlined_call_operand.hbm [shape: f32[4,256], index: 1, kind: input, shape index: {}]
  %s2 = inlined_call_operand.vmem [shape: f32[24,1], index: 2, kind: input, shape index: {}]
  %s3 = inlined_call_operand.vmem [shape: f32[24,1], index: 3, kind: input, shape index: {}]
  %s4 = inlined_call_operand.vmem [shape: f32[32,3], index: 4, kind: input, shape index: {}]
  %s5 = inlined_call_operand.vmem [shape: f32[32,1], index: 5, kind: input, shape index: {}]
  %s6 = inlined_call_operand.vmem [shape: f32[32,128], index: 6, kind: input, shape index: {}]
  %s7 = inlined_call_operand.vmem [shape: f32[1,128], index: 7, kind: input, shape index: {}]
  %s8 = inlined_call_operand.vmem [shape: f32[2,128], index: 8, kind: input, shape index: {}]
  %s9 = inlined_call_operand.vmem [shape: f32[1,2], index: 9, kind: input, shape index: {}]
  %s10 = inlined_call_operand.vmem [shape: f32[16,2], index: 10, kind: output, shape index: {}]
  %s11 = sld [smem:[#allocation0]]
  $region77: #{tpu_custom_call.1} parent=0
    _
  %s13 = ssub.s32 1, %s11
  %s14 = scalar_select 0, %s13, %s11
  $region1: #{tpu_custom_call.1} parent=0
    #allocation2 [shape = 'u8[4096]{0}', space=vmem, size = 0x1000, scoped, tag = 'input window, operand 1, single buffered']
    #allocation3 [shape = 's32[2]{0}', space=sflag, size = 0x8, scoped, tag = 'scoped memory for tpu_custom_call.1']
    %15 = vsyncpa [#allocation3], 0
    loop: start=0, step=1, limit=4
    $region2: #{tpu_custom_call.1} parent=1 // loop_pre_header
      _
    $region3: #{tpu_custom_call.1} parent=1 // loop_header
      %s17 = sphi 0, %s21
      %p18 = scmp.ge.s32.totalorder %s17, 4
      %s27 = sphi 0, %s29
      %s30 = sphi 0, %s27
      %s31 = sphi 0, %s30
      %s47 = sphi 0, %s31
      %s51 = sphi 0, %s51
      %s53 = sphi 0, %s51
      %s54 = sphi 0, %s53
      %s68 = sphi 0, %s54
      %s72 = sphi 0, %s72
      %s74 = sphi 0, %s72
      %s75 = sphi 0, %s74
      %s89 = sphi 0, %s75
      %s93 = sphi 0, %s93
      %s95 = sphi 0, %s93
      %s96 = sphi 0, %s95
      %s110 = sphi 0, %s96
      %s114 = sphi 0, %s114
      %s116 = sphi 0, %s114
      %s117 = sphi 0, %s116
      %s131 = sphi 0, %s117
      %s135 = sphi 0, %s135
      %s137 = sphi 0, %s135
      %s138 = sphi 0, %s137
      %s152 = sphi 0, %s138
      %s156 = sphi 0, %s156
      %s158 = sphi 0, %s156
      %s159 = sphi 0, %s158
      %s173 = sphi 0, %s159
      %s177 = sphi 0, %s177
      %s179 = sphi 0, %s177
      %s180 = sphi 0, %s179
      %s194 = sphi 0, %s180
      %s198 = sphi 0, %s198
      %s200 = sphi 0, %s198
      %s201 = sphi 0, %s200
      %s215 = sphi 0, %s201
      %s219 = sphi 0, %s219
      %s221 = sphi 0, %s219
      %s222 = sphi 0, %s221
      %s236 = sphi 0, %s222
      %s242 = sphi 0, %s244
      %s245 = sphi 0, %s242
      %s246 = sphi 0, %s245
      %s262 = sphi 0, %s246
    $region4: #{tpu_custom_call.1} parent=1 // loop_header_branch
      %20 = sbr.rel (%p18) target = $region8
    $region5: #{tpu_custom_call.1} parent=1 // loop_body
      %s22 = ssub.s32 %s17, 1
      %s23 = ssub.s32 %s17, 2
      %s24 = sadd.s32 %s17, 1
      %s25 = ssub.s32 %s17, %s24
      %p26 = scmp.eq.s32.totalorder %s25, 0
      %s28 = sadd.s32 %s27, 1
      %s29 = scalar_select %p26, %s27, %s28
      %p32 = pneg %p26
      %p33 = scmp.eq.s32.totalorder %s17, 1
      %p34 = por %p32, %p33
      %p35 = scmp.ne.s32.totalorder %s27, %s30
      %p36 = scmp.eq.s32.totalorder %s17, 0
      %p37 = por %p35, %p36
      %p38 = scmp.ne.s32.totalorder %s27, %s30
      %p39 = scmp.eq.s32.totalorder %s22, 1
      %p40 = por %p38, %p39
      %p41 = scmp.ne.s32.totalorder %s30, %s31
      %p42 = scmp.eq.s32.totalorder %s22, 0
      %p43 = por %p41, %p42
      %p44 = scmp.ne.s32.totalorder %s30, %s31
      %p45 = scmp.eq.s32.totalorder %s23, 1
      %p46 = por %p44, %p45
      %p48 = scmp.ne.s32.totalorder %s31, %s47
      %p49 = scmp.eq.s32.totalorder %s23, 0
      %p50 = por %p48, %p49
      %s52 = sadd.s32 %s51, 1
      %p55 = scmp.eq.s32.totalorder %s17, 1
      %p56 = scmp.ne.s32.totalorder %s51, %s53
      %p57 = scmp.eq.s32.totalorder %s17, 0
      %p58 = por %p56, %p57
      %p59 = scmp.ne.s32.totalorder %s51, %s53
      %p60 = scmp.eq.s32.totalorder %s22, 1
      %p61 = por %p59, %p60
      %p62 = scmp.ne.s32.totalorder %s53, %s54
      %p63 = scmp.eq.s32.totalorder %s22, 0
      %p64 = por %p62, %p63
      %p65 = scmp.ne.s32.totalorder %s53, %s54
      %p66 = scmp.eq.s32.totalorder %s23, 1
      %p67 = por %p65, %p66
      %p69 = scmp.ne.s32.totalorder %s54, %s68
      %p70 = scmp.eq.s32.totalorder %s23, 0
      %p71 = por %p69, %p70
      %s73 = sadd.s32 %s72, 1
      %p76 = scmp.eq.s32.totalorder %s17, 1
      %p77 = scmp.ne.s32.totalorder %s72, %s74
      %p78 = scmp.eq.s32.totalorder %s17, 0
      %p79 = por %p77, %p78
      %p80 = scmp.ne.s32.totalorder %s72, %s74
      %p81 = scmp.eq.s32.totalorder %s22, 1
      %p82 = por %p80, %p81
      %p83 = scmp.ne.s32.totalorder %s74, %s75
      %p84 = scmp.eq.s32.totalorder %s22, 0
      %p85 = por %p83, %p84
      %p86 = scmp.ne.s32.totalorder %s74, %s75
      %p87 = scmp.eq.s32.totalorder %s23, 1
      %p88 = por %p86, %p87
      %p90 = scmp.ne.s32.totalorder %s75, %s89
      %p91 = scmp.eq.s32.totalorder %s23, 0
      %p92 = por %p90, %p91
      %s94 = sadd.s32 %s93, 1
      %p97 = scmp.eq.s32.totalorder %s17, 1
      %p98 = scmp.ne.s32.totalorder %s93, %s95
      %p99 = scmp.eq.s32.totalorder %s17, 0
      %p100 = por %p98, %p99
      %p101 = scmp.ne.s32.totalorder %s93, %s95
      %p102 = scmp.eq.s32.totalorder %s22, 1
      %p103 = por %p101, %p102
      %p104 = scmp.ne.s32.totalorder %s95, %s96
      %p105 = scmp.eq.s32.totalorder %s22, 0
      %p106 = por %p104, %p105
      %p107 = scmp.ne.s32.totalorder %s95, %s96
      %p108 = scmp.eq.s32.totalorder %s23, 1
      %p109 = por %p107, %p108
      %p111 = scmp.ne.s32.totalorder %s96, %s110
      %p112 = scmp.eq.s32.totalorder %s23, 0
      %p113 = por %p111, %p112
      %s115 = sadd.s32 %s114, 1
      %p118 = scmp.eq.s32.totalorder %s17, 1
      %p119 = scmp.ne.s32.totalorder %s114, %s116
      %p120 = scmp.eq.s32.totalorder %s17, 0
      %p121 = por %p119, %p120
      %p122 = scmp.ne.s32.totalorder %s114, %s116
      %p123 = scmp.eq.s32.totalorder %s22, 1
      %p124 = por %p122, %p123
      %p125 = scmp.ne.s32.totalorder %s116, %s117
      %p126 = scmp.eq.s32.totalorder %s22, 0
      %p127 = por %p125, %p126
      %p128 = scmp.ne.s32.totalorder %s116, %s117
      %p129 = scmp.eq.s32.totalorder %s23, 1
      %p130 = por %p128, %p129
      %p132 = scmp.ne.s32.totalorder %s117, %s131
      %p133 = scmp.eq.s32.totalorder %s23, 0
      %p134 = por %p132, %p133
      %s136 = sadd.s32 %s135, 1
      %p139 = scmp.eq.s32.totalorder %s17, 1
      %p140 = scmp.ne.s32.totalorder %s135, %s137
      %p141 = scmp.eq.s32.totalorder %s17, 0
      %p142 = por %p140, %p141
      %p143 = scmp.ne.s32.totalorder %s135, %s137
      %p144 = scmp.eq.s32.totalorder %s22, 1
      %p145 = por %p143, %p144
      %p146 = scmp.ne.s32.totalorder %s137, %s138
      %p147 = scmp.eq.s32.totalorder %s22, 0
      %p148 = por %p146, %p147
      %p149 = scmp.ne.s32.totalorder %s137, %s138
      %p150 = scmp.eq.s32.totalorder %s23, 1
      %p151 = por %p149, %p150
      %p153 = scmp.ne.s32.totalorder %s138, %s152
      %p154 = scmp.eq.s32.totalorder %s23, 0
      %p155 = por %p153, %p154
      %s157 = sadd.s32 %s156, 1
      %p160 = scmp.eq.s32.totalorder %s17, 1
      %p161 = scmp.ne.s32.totalorder %s156, %s158
      %p162 = scmp.eq.s32.totalorder %s17, 0
      %p163 = por %p161, %p162
      %p164 = scmp.ne.s32.totalorder %s156, %s158
      %p165 = scmp.eq.s32.totalorder %s22, 1
      %p166 = por %p164, %p165
      %p167 = scmp.ne.s32.totalorder %s158, %s159
      %p168 = scmp.eq.s32.totalorder %s22, 0
      %p169 = por %p167, %p168
      %p170 = scmp.ne.s32.totalorder %s158, %s159
      %p171 = scmp.eq.s32.totalorder %s23, 1
      %p172 = por %p170, %p171
      %p174 = scmp.ne.s32.totalorder %s159, %s173
      %p175 = scmp.eq.s32.totalorder %s23, 0
      %p176 = por %p174, %p175
      %s178 = sadd.s32 %s177, 1
      %p181 = scmp.eq.s32.totalorder %s17, 1
      %p182 = scmp.ne.s32.totalorder %s177, %s179
      %p183 = scmp.eq.s32.totalorder %s17, 0
      %p184 = por %p182, %p183
      %p185 = scmp.ne.s32.totalorder %s177, %s179
      %p186 = scmp.eq.s32.totalorder %s22, 1
      %p187 = por %p185, %p186
      %p188 = scmp.ne.s32.totalorder %s179, %s180
      %p189 = scmp.eq.s32.totalorder %s22, 0
      %p190 = por %p188, %p189
      %p191 = scmp.ne.s32.totalorder %s179, %s180
      %p192 = scmp.eq.s32.totalorder %s23, 1
      %p193 = por %p191, %p192
      %p195 = scmp.ne.s32.totalorder %s180, %s194
      %p196 = scmp.eq.s32.totalorder %s23, 0
      %p197 = por %p195, %p196
      %s199 = sadd.s32 %s198, 1
      %p202 = scmp.eq.s32.totalorder %s17, 1
      %p203 = scmp.ne.s32.totalorder %s198, %s200
      %p204 = scmp.eq.s32.totalorder %s17, 0
      %p205 = por %p203, %p204
      %p206 = scmp.ne.s32.totalorder %s198, %s200
      %p207 = scmp.eq.s32.totalorder %s22, 1
      %p208 = por %p206, %p207
      %p209 = scmp.ne.s32.totalorder %s200, %s201
      %p210 = scmp.eq.s32.totalorder %s22, 0
      %p211 = por %p209, %p210
      %p212 = scmp.ne.s32.totalorder %s200, %s201
      %p213 = scmp.eq.s32.totalorder %s23, 1
      %p214 = por %p212, %p213
      %p216 = scmp.ne.s32.totalorder %s201, %s215
      %p217 = scmp.eq.s32.totalorder %s23, 0
      %p218 = por %p216, %p217
      %s220 = sadd.s32 %s219, 1
      %p223 = scmp.eq.s32.totalorder %s17, 1
      %p224 = scmp.ne.s32.totalorder %s219, %s221
      %p225 = scmp.eq.s32.totalorder %s17, 0
      %p226 = por %p224, %p225
      %p227 = scmp.ne.s32.totalorder %s219, %s221
      %p228 = scmp.eq.s32.totalorder %s22, 1
      %p229 = por %p227, %p228
      %p230 = scmp.ne.s32.totalorder %s221, %s222
      %p231 = scmp.eq.s32.totalorder %s22, 0
      %p232 = por %p230, %p231
      %p233 = scmp.ne.s32.totalorder %s221, %s222
      %p234 = scmp.eq.s32.totalorder %s23, 1
      %p235 = por %p233, %p234
      %p237 = scmp.ne.s32.totalorder %s222, %s236
      %p238 = scmp.eq.s32.totalorder %s23, 0
      %p239 = por %p237, %p238
      %s240 = ssub.s32 %s17, %s24
      %p241 = scmp.eq.s32.totalorder %s240, 0
      %s243 = sadd.s32 %s242, 1
      %s244 = scalar_select %p241, %s242, %s243
      %p247 = pneg %p241
      %p248 = scmp.eq.s32.totalorder %s17, 1
      %p249 = por %p247, %p248
      %p250 = scmp.ne.s32.totalorder %s242, %s245
      %p251 = scmp.eq.s32.totalorder %s17, 0
      %p252 = por %p250, %p251
      %p253 = scmp.ne.s32.totalorder %s242, %s245
      %p254 = scmp.eq.s32.totalorder %s22, 1
      %p255 = por %p253, %p254
      %p256 = scmp.ne.s32.totalorder %s245, %s246
      %p257 = scmp.eq.s32.totalorder %s22, 0
      %p258 = por %p256, %p257
      %p259 = scmp.ne.s32.totalorder %s245, %s246
      %p260 = scmp.eq.s32.totalorder %s23, 1
      %p261 = por %p259, %p260
      %p263 = scmp.ne.s32.totalorder %s246, %s262
      %p264 = scmp.eq.s32.totalorder %s23, 0
      %p265 = por %p263, %p264
      %p266 = scmp.le.s32.totalorder 1, %s17
      %p267 = scmp.lt.s32.totalorder %s17, 3
      %p268 = pnand %p266, %p267
      %p269 = pneg %p268
      // Predicated region
      $region9: #{tpu_custom_call.1} parent=5 // pred_check
        _
      $region10: #{tpu_custom_call.1} parent=5 // pred_check_branch
        %271 = sbr.rel (%p268) target = $region12
      $region11: #{tpu_custom_call.1} parent=5 // pred_region
        %s272 = ssub.s32 %s17, 1
        // Predicated region
        $region13: #{tpu_custom_call.1} parent=11 // pred_check
          %p273 = pneg %p64
        $region14: #{tpu_custom_call.1} parent=11 // pred_check_branch
          %275 = sbr.rel (%p273) target = $region16
        $region15: #{tpu_custom_call.1} parent=11 // pred_region
          %s277 = ssub.s32 128, 128
          %278 = vsyncadd [#allocation3], %s277
          %s280 = sshll.u32 [#allocation2], 4
          %s281 = int_to_ptr.vmem [resolvable:$true] %s280
          %283 = dma.hbm_to_vmem [thread:$0]  %s1, 128, %s281, [#allocation3]
        $region16: #{tpu_custom_call.1} parent=11 // pred_fallthru
          _
        // Predicated region
        $region17: #{tpu_custom_call.1} parent=11 // pred_check
          %p284 = pneg %p85
        $region18: #{tpu_custom_call.1} parent=11 // pred_check_branch
          %286 = sbr.rel (%p284) target = $region20
        $region19: #{tpu_custom_call.1} parent=11 // pred_region
          _
        $region20: #{tpu_custom_call.1} parent=11 // pred_fallthru
          _
        // Predicated region
        $region21: #{tpu_custom_call.1} parent=11 // pred_check
          %p287 = pneg %p106
        $region22: #{tpu_custom_call.1} parent=11 // pred_check_branch
          %289 = sbr.rel (%p287) target = $region24
        $region23: #{tpu_custom_call.1} parent=11 // pred_region
          _
        $region24: #{tpu_custom_call.1} parent=11 // pred_fallthru
          _
        // Predicated region
        $region25: #{tpu_custom_call.1} parent=11 // pred_check
          %p290 = pneg %p127
        $region26: #{tpu_custom_call.1} parent=11 // pred_check_branch
          %292 = sbr.rel (%p290) target = $region28
        $region27: #{tpu_custom_call.1} parent=11 // pred_region
          _
        $region28: #{tpu_custom_call.1} parent=11 // pred_fallthru
          _
        // Predicated region
        $region29: #{tpu_custom_call.1} parent=11 // pred_check
          %p293 = pneg %p148
        $region30: #{tpu_custom_call.1} parent=11 // pred_check_branch
          %295 = sbr.rel (%p293) target = $region32
        $region31: #{tpu_custom_call.1} parent=11 // pred_region
          _
        $region32: #{tpu_custom_call.1} parent=11 // pred_fallthru
          _
        // Predicated region
        $region33: #{tpu_custom_call.1} parent=11 // pred_check
          %p296 = pneg %p169
        $region34: #{tpu_custom_call.1} parent=11 // pred_check_branch
          %298 = sbr.rel (%p296) target = $region36
        $region35: #{tpu_custom_call.1} parent=11 // pred_region
          _
        $region36: #{tpu_custom_call.1} parent=11 // pred_fallthru
          _
        // Predicated region
        $region37: #{tpu_custom_call.1} parent=11 // pred_check
          %p299 = pneg %p190
        $region38: #{tpu_custom_call.1} parent=11 // pred_check_branch
          %301 = sbr.rel (%p299) target = $region40
        $region39: #{tpu_custom_call.1} parent=11 // pred_region
          _
        $region40: #{tpu_custom_call.1} parent=11 // pred_fallthru
          _
        // Predicated region
        $region41: #{tpu_custom_call.1} parent=11 // pred_check
          %p302 = pneg %p211
        $region42: #{tpu_custom_call.1} parent=11 // pred_check_branch
          %304 = sbr.rel (%p302) target = $region44
        $region43: #{tpu_custom_call.1} parent=11 // pred_region
          _
        $region44: #{tpu_custom_call.1} parent=11 // pred_fallthru
          _
        // Predicated region
        $region45: #{tpu_custom_call.1} parent=11 // pred_check
          %p305 = pneg %p232
        $region46: #{tpu_custom_call.1} parent=11 // pred_check_branch
          %307 = sbr.rel (%p305) target = $region48
        $region47: #{tpu_custom_call.1} parent=11 // pred_region
          _
        $region48: #{tpu_custom_call.1} parent=11 // pred_fallthru
          _
      $region12: #{tpu_custom_call.1} parent=5 // pred_fallthru
        _
      %p308 = scmp.lt.s32.totalorder %s17, 2
      // Predicated region
      $region49: #{tpu_custom_call.1} parent=5 // pred_check
        %p309 = pneg %p308
      $region50: #{tpu_custom_call.1} parent=5 // pred_check_branch
        %311 = sbr.rel (%p309) target = $region52
      $region51: #{tpu_custom_call.1} parent=5 // pred_region
        // Predicated region
        $region53: #{tpu_custom_call.1} parent=51 // pred_check
          %p312 = pneg %p37
        $region54: #{tpu_custom_call.1} parent=51 // pred_check_branch
          %314 = sbr.rel (%p312) target = $region56
        $region55: #{tpu_custom_call.1} parent=51 // pred_region
          %s315 = smul.u32 3, %s17
          %p316 = scmp.lt.s32.totalorder %s315, 5
          %s317 = scalar_select %p316, %s315, 5
          %s318 = smul.addr %s317, 2
          %s319 = smul.addr %s318, 8
          %s320 = scalar_lea.vmem %s0, %s319
          %s321 = smul.u32 3, %s17
        $region56: #{tpu_custom_call.1} parent=51 // pred_fallthru
          _
      $region52: #{tpu_custom_call.1} parent=5 // pred_fallthru
        _
      %p322 = scmp.le.s32.totalorder 1, %s17
      %p323 = scmp.lt.s32.totalorder %s17, 3
      %p324 = pnand %p322, %p323
      %p325 = pneg %p324
      // Predicated region
      $region57: #{tpu_custom_call.1} parent=5 // pred_check
        _
      $region58: #{tpu_custom_call.1} parent=5 // pred_check_branch
        %327 = sbr.rel (%p324) target = $region60
      $region59: #{tpu_custom_call.1} parent=5 // pred_region
        %s328 = ssub.s32 %s17, 1
        // Predicated region
        $region61: #{tpu_custom_call.1} parent=59 // pred_check
          %p329 = pneg %p64
        $region62: #{tpu_custom_call.1} parent=59 // pred_check_branch
          %331 = sbr.rel (%p329) target = $region64
        $region63: #{tpu_custom_call.1} parent=59 // pred_region
          %332 = dma.done [#allocation3], 128
        $region64: #{tpu_custom_call.1} parent=59 // pred_fallthru
          _
        %s333 = smul.u32 3, %s22
        %p334 = scmp.lt.s32.totalorder %s333, 5
        %s335 = scalar_select %p334, %s333, 5
        %s336 = smul.addr %s335, 2
        %s337 = smul.addr %s336, 8
        %s338 = scalar_lea.vmem %s0, %s337
        %p339 = pneg %p43
        %p340 = pneg %p40
        %p341 = pneg %p64
        %p342 = pneg %p61
        %p343 = pneg %p85
        %p344 = pneg %p82
        %p345 = pneg %p106
        %p346 = pneg %p103
        %p347 = pneg %p127
        %p348 = pneg %p124
        %p349 = pneg %p148
        %p350 = pneg %p145
        %p351 = pneg %p169
        %p352 = pneg %p166
        %p353 = pneg %p190
        %p354 = pneg %p187
        %p355 = pneg %p211
        %p356 = pneg %p208
        %p357 = pneg %p232
        %p358 = pneg %p229
        %p359 = pneg %p258
        %p360 = pneg %p255
        %p361 = scmp.lt.s32.totalorder %s22, 1
        %s362 = scalar_select %p361, %s22, 1
        %s363 = smul.addr %s362, 8
        %s364 = scalar_lea.vmem %s10, %s363
        %s365 = smul.u32 3, %s22
        %p366 = scmp.lt.s32.totalorder %s365, 5
        %s367 = scalar_select %p366, %s365, 5
        %s368 = smul.addr %s367, 2
        %s369 = smul.addr %s368, 8
        %s370 = scalar_lea.vmem %s0, %s369
        %s371 = smul.u32 3, %s22
        %p372 = scmp.lt.s32.totalorder %s22, 1
        %s373 = scalar_select %p372, %s22, 1
        %s374 = smul.addr %s373, 8
        %s375 = scalar_lea.vmem %s10, %s374
        %v376 = vld [vmem:[%s370] sm:$0xff]
        %v377 = vld [vmem:[%s370 + $0x8] sm:$0xff]
        %v378 = vld [vmem:[%s370 + $0x10] sm:$0xff]
        %v379 = vld [vmem:[%s370 + $0x18] sm:$0xff]
        %v380 = vld [vmem:[%s370 + $0x20] sm:$0xff]
        %v381 = vld [vmem:[%s370 + $0x28] sm:$0xff]
        %v382 = vld [vmem:[#allocation2] ss:$4 sm:$0x3]
        %v384 = vlaneseq
        %v385 = vshrl.u32 %v384, 7
        %v386 = vsub.s32 0, %v385
        %v387 = vrot.slane %v382, %v386
        %v388 = vlaneseq
        %v389 = vshrl.u32 %v388, 7
        %v390 = vsub.s32 1, %v389
        %v391 = vrot.slane %v382, %v390
        %s394 = scalar_lea.vmem [#allocation2], 1
        %v395 = vld [vmem:[%s394] ss:$4 sm:$0x3]
        %v397 = vlaneseq
        %v398 = vshrl.u32 %v397, 7
        %v399 = vsub.s32 0, %v398
        %v400 = vrot.slane %v395, %v399
        %v401 = vlaneseq
        %v402 = vshrl.u32 %v401, 7
        %v403 = vsub.s32 1, %v402
        %v404 = vrot.slane %v395, %v403
        %s407 = scalar_lea.vmem [#allocation2], 2
        %v408 = vld [vmem:[%s407] ss:$4 sm:$0x3]
        %v410 = vlaneseq
        %v411 = vshrl.u32 %v410, 7
        %v412 = vsub.s32 0, %v411
        %v413 = vrot.slane %v408, %v412
        %v414 = vlaneseq
        %v415 = vshrl.u32 %v414, 7
        %v416 = vsub.s32 1, %v415
        %v417 = vrot.slane %v408, %v416
        %s420 = scalar_lea.vmem [#allocation2], 3
        %v421 = vld [vmem:[%s420] ss:$4 sm:$0x3]
        %v423 = vlaneseq
        %v424 = vshrl.u32 %v423, 7
        %v425 = vsub.s32 0, %v424
        %v426 = vrot.slane %v421, %v425
        %v427 = vlaneseq
        %v428 = vshrl.u32 %v427, 7
        %v429 = vsub.s32 1, %v428
        %v430 = vrot.slane %v421, %v429
        %433 = vrot.lane.b32.xlu0 %v376, 1
        %v434 = vpop.permute.xlu0 %433
        %435 = vrot.lane.b32.xlu0 %v378, 1
        %v436 = vpop.permute.xlu0 %435
        %437 = vrot.lane.b32.xlu0 %v380, 1
        %v438 = vpop.permute.xlu0 %437
        %439 = vrot.lane.b32.xlu0 %v377, 1
        %v440 = vpop.permute.xlu0 %439
        %441 = vrot.lane.b32.xlu0 %v379, 1
        %v442 = vpop.permute.xlu0 %441
        %443 = vrot.lane.b32.xlu0 %v381, 1
        %v444 = vpop.permute.xlu0 %443
        %v445 = vlaneseq
        %v446 = vand.u32 %v445, 127
        %vm447 = vcmp.lt.s32.totalorder %v446, 1
        %v448 = vsel %vm447, %v434, %v440
        %v449 = vsel %vm447, %v436, %v442
        %v450 = vsel %vm447, %v438, %v444
        %v451 = vsel %vm447, %v440, %v434
        %v452 = vsel %vm447, %v442, %v436
        %v453 = vsel %vm447, %v444, %v438
        %v454 = vmul.f32 %v451, %v387
        %v455 = vmul.f32 %v448, %v391
        %v456 = vmul.f32 %v452, %v387
        %v457 = vmul.f32 %v449, %v391
        %v458 = vmul.f32 %v453, %v387
        %v459 = vmul.f32 %v450, %v391
        %460 = vrot.lane.b32.xlu0 %v376, 127
        %v461 = vpop.permute.xlu0 %460
        %462 = vrot.lane.b32.xlu0 %v378, 127
        %v463 = vpop.permute.xlu0 %462
        %464 = vrot.lane.b32.xlu0 %v380, 127
        %v465 = vpop.permute.xlu0 %464
        %466 = vrot.lane.b32.xlu0 %v377, 127
        %v467 = vpop.permute.xlu0 %466
        %468 = vrot.lane.b32.xlu0 %v379, 127
        %v469 = vpop.permute.xlu0 %468
        %470 = vrot.lane.b32.xlu0 %v381, 127
        %v471 = vpop.permute.xlu0 %470
        %vm472 = vcmp.lt.s32.totalorder %v446, 127
        %v473 = vsel %vm472, %v461, %v467
        %v474 = vsel %vm472, %v463, %v469
        %v475 = vsel %vm472, %v465, %v471
        %v476 = vsel %vm472, %v467, %v461
        %v477 = vsel %vm472, %v469, %v463
        %v478 = vsel %vm472, %v471, %v465
        %v479 = vmul.f32 %v473, %v400
        %v480 = vmul.f32 %v476, %v404
        %v481 = vmul.f32 %v474, %v400
        %v482 = vmul.f32 %v477, %v404
        %v483 = vmul.f32 %v475, %v400
        %v484 = vmul.f32 %v478, %v404
        %v485 = vsub.f32 %v454, %v479
        %v486 = vsub.f32 %v455, %v480
        %v487 = vsub.f32 %v456, %v481
        %v488 = vsub.f32 %v457, %v482
        %v489 = vsub.f32 %v458, %v483
        %v490 = vsub.f32 %v459, %v484
        %v491 = vmul.f32 %v376, 2.0
        %v492 = vmul.f32 %v377, 2.0
        %v493 = vmul.f32 %v378, 2.0
        %v494 = vmul.f32 %v379, 2.0
        %v495 = vmul.f32 %v380, 2.0
        %v496 = vmul.f32 %v381, 2.0
        %v497 = vadd.f32 %v454, %v491
        %v498 = vadd.f32 %v455, %v492
        %v499 = vadd.f32 %v456, %v493
        %v500 = vadd.f32 %v457, %v494
        %v501 = vadd.f32 %v458, %v495
        %v502 = vadd.f32 %v459, %v496
        %v503 = vadd.f32 %v497, %v479
        %v504 = vadd.f32 %v498, %v480
        %v505 = vadd.f32 %v499, %v481
        %v506 = vadd.f32 %v500, %v482
        %v507 = vadd.f32 %v501, %v483
        %v508 = vadd.f32 %v502, %v484
        %509 = vrot.lane.b32.xlu0 %v485, 16
        %v510 = vpop.permute.xlu0 %509
        %511 = vrot.lane.b32.xlu0 %v487, 16
        %v512 = vpop.permute.xlu0 %511
        %513 = vrot.lane.b32.xlu0 %v489, 16
        %v514 = vpop.permute.xlu0 %513
        %515 = vrot.lane.b32.xlu0 %v486, 16
        %v516 = vpop.permute.xlu0 %515
        %517 = vrot.lane.b32.xlu0 %v488, 16
        %v518 = vpop.permute.xlu0 %517
        %519 = vrot.lane.b32.xlu0 %v490, 16
        %v520 = vpop.permute.xlu0 %519
        %vm521 = vcmp.lt.s32.totalorder %v446, 16
        %v522 = vsel %vm521, %v510, %v516
        %v523 = vsel %vm521, %v512, %v518
        %v524 = vsel %vm521, %v514, %v520
        %v525 = vsel %vm521, %v516, %v510
        %v526 = vsel %vm521, %v518, %v512
        %v527 = vsel %vm521, %v520, %v514
        %v528 = vmul.f32 %v525, %v413
        %v529 = vmul.f32 %v522, %v417
        %v530 = vmul.f32 %v526, %v413
        %v531 = vmul.f32 %v523, %v417
        %v532 = vmul.f32 %v527, %v413
        %v533 = vmul.f32 %v524, %v417
        %v534 = vmul.f32 %v485, 2.0
        %v535 = vmul.f32 %v486, 2.0
        %v536 = vmul.f32 %v487, 2.0
        %v537 = vmul.f32 %v488, 2.0
        %v538 = vmul.f32 %v489, 2.0
        %v539 = vmul.f32 %v490, 2.0
        %v540 = vadd.f32 %v528, %v534
        %v541 = vadd.f32 %v529, %v535
        %v542 = vadd.f32 %v530, %v536
        %v543 = vadd.f32 %v531, %v537
        %v544 = vadd.f32 %v532, %v538
        %v545 = vadd.f32 %v533, %v539
        %546 = vrot.lane.b32.xlu0 %v485, 112
        %v547 = vpop.permute.xlu0 %546
        %548 = vrot.lane.b32.xlu0 %v487, 112
        %v549 = vpop.permute.xlu0 %548
        %550 = vrot.lane.b32.xlu0 %v489, 112
        %v551 = vpop.permute.xlu0 %550
        %552 = vrot.lane.b32.xlu0 %v486, 112
        %v553 = vpop.permute.xlu0 %552
        %554 = vrot.lane.b32.xlu0 %v488, 112
        %v555 = vpop.permute.xlu0 %554
        %556 = vrot.lane.b32.xlu0 %v490, 112
        %v557 = vpop.permute.xlu0 %556
        %vm558 = vcmp.lt.s32.totalorder %v446, 112
        %v559 = vsel %vm558, %v547, %v553
        %v560 = vsel %vm558, %v549, %v555
        %v561 = vsel %vm558, %v551, %v557
        %v562 = vsel %vm558, %v553, %v547
        %v563 = vsel %vm558, %v555, %v549
        %v564 = vsel %vm558, %v557, %v551
        %v565 = vmul.f32 %v559, %v426
        %v566 = vmul.f32 %v562, %v430
        %v567 = vmul.f32 %v560, %v426
        %v568 = vmul.f32 %v563, %v430
        %v569 = vmul.f32 %v561, %v426
        %v570 = vmul.f32 %v564, %v430
        %v571 = vadd.f32 %v540, %v565
        %v572 = vadd.f32 %v541, %v566
        %v573 = vadd.f32 %v542, %v567
        %v574 = vadd.f32 %v543, %v568
        %v575 = vadd.f32 %v544, %v569
        %v576 = vadd.f32 %v545, %v570
        %v577 = vld [vmem:[%s2] sm:$0xff]
        %v578 = vld [vmem:[%s2 + $0x8] sm:$0xff]
        %v579 = vld [vmem:[%s2 + $0x10] sm:$0xff]
        %581 = vset.pattern.permute.xlu0 0
        %582 = vperm.xlu0 %581, %v577
        %v583 = vpop.permute.xlu0 %582
        %586 = vset.pattern.permute.xlu0 0
        %587 = vperm.xlu0 %586, %v578
        %v588 = vpop.permute.xlu0 %587
        %591 = vset.pattern.permute.xlu0 0
        %592 = vperm.xlu0 %591, %v579
        %v593 = vpop.permute.xlu0 %592
        %v595 = vadd.f32 %v571, %v583
        %v596 = vadd.f32 %v572, %v583
        %v597 = vadd.f32 %v573, %v588
        %v598 = vadd.f32 %v574, %v588
        %v599 = vadd.f32 %v575, %v593
        %v600 = vadd.f32 %v576, %v593
        %601 = vrot.lane.b32.xlu0 %v503, 16
        %v602 = vpop.permute.xlu0 %601
        %603 = vrot.lane.b32.xlu0 %v505, 16
        %v604 = vpop.permute.xlu0 %603
        %605 = vrot.lane.b32.xlu0 %v507, 16
        %v606 = vpop.permute.xlu0 %605
        %607 = vrot.lane.b32.xlu0 %v504, 16
        %v608 = vpop.permute.xlu0 %607
        %609 = vrot.lane.b32.xlu0 %v506, 16
        %v610 = vpop.permute.xlu0 %609
        %611 = vrot.lane.b32.xlu0 %v508, 16
        %v612 = vpop.permute.xlu0 %611
        %v613 = vsel %vm521, %v602, %v608
        %v614 = vsel %vm521, %v604, %v610
        %v615 = vsel %vm521, %v606, %v612
        %v616 = vsel %vm521, %v608, %v602
        %v617 = vsel %vm521, %v610, %v604
        %v618 = vsel %vm521, %v612, %v606
        %v619 = vmul.f32 %v616, %v413
        %v620 = vmul.f32 %v613, %v417
        %v621 = vmul.f32 %v617, %v413
        %v622 = vmul.f32 %v614, %v417
        %v623 = vmul.f32 %v618, %v413
        %v624 = vmul.f32 %v615, %v417
        %625 = vrot.lane.b32.xlu0 %v503, 112
        %v626 = vpop.permute.xlu0 %625
        %627 = vrot.lane.b32.xlu0 %v505, 112
        %v628 = vpop.permute.xlu0 %627
        %629 = vrot.lane.b32.xlu0 %v507, 112
        %v630 = vpop.permute.xlu0 %629
        %631 = vrot.lane.b32.xlu0 %v504, 112
        %v632 = vpop.permute.xlu0 %631
        %633 = vrot.lane.b32.xlu0 %v506, 112
        %v634 = vpop.permute.xlu0 %633
        %635 = vrot.lane.b32.xlu0 %v508, 112
        %v636 = vpop.permute.xlu0 %635
        %v637 = vsel %vm558, %v626, %v632
        %v638 = vsel %vm558, %v628, %v634
        %v639 = vsel %vm558, %v630, %v636
        %v640 = vsel %vm558, %v632, %v626
        %v641 = vsel %vm558, %v634, %v628
        %v642 = vsel %vm558, %v636, %v630
        %v643 = vmul.f32 %v637, %v426
        %v644 = vmul.f32 %v640, %v430
        %v645 = vmul.f32 %v638, %v426
        %v646 = vmul.f32 %v641, %v430
        %v647 = vmul.f32 %v639, %v426
        %v648 = vmul.f32 %v642, %v430
        %v649 = vsub.f32 %v619, %v643
        %v650 = vsub.f32 %v620, %v644
        %v651 = vsub.f32 %v621, %v645
        %v652 = vsub.f32 %v622, %v646
        %v653 = vsub.f32 %v623, %v647
        %v654 = vsub.f32 %v624, %v648
        %v655 = vld [vmem:[%s3] sm:$0xff]
        %v656 = vld [vmem:[%s3 + $0x8] sm:$0xff]
        %v657 = vld [vmem:[%s3 + $0x10] sm:$0xff]
        %659 = vset.pattern.permute.xlu0 0
        %660 = vperm.xlu0 %659, %v655
        %v661 = vpop.permute.xlu0 %660
        %664 = vset.pattern.permute.xlu0 0
        %665 = vperm.xlu0 %664, %v656
        %v666 = vpop.permute.xlu0 %665
        %669 = vset.pattern.permute.xlu0 0
        %670 = vperm.xlu0 %669, %v657
        %v671 = vpop.permute.xlu0 %670
        %v673 = vadd.f32 %v649, %v661
        %v674 = vadd.f32 %v650, %v661
        %v675 = vadd.f32 %v651, %v666
        %v676 = vadd.f32 %v652, %v666
        %v677 = vadd.f32 %v653, %v671
        %v678 = vadd.f32 %v654, %v671
        %v679 = vmul.f32 %v595, %v595
        %v680 = vmul.f32 %v596, %v596
        %v681 = vmul.f32 %v597, %v597
        %v682 = vmul.f32 %v598, %v598
        %v683 = vmul.f32 %v599, %v599
        %v684 = vmul.f32 %v600, %v600
        %v685 = vmul.f32 %v673, %v673
        %v686 = vmul.f32 %v674, %v674
        %v687 = vmul.f32 %v675, %v675
        %v688 = vmul.f32 %v676, %v676
        %v689 = vmul.f32 %v677, %v677
        %v690 = vmul.f32 %v678, %v678
        %v691 = vadd.f32 %v679, %v685
        %v692 = vadd.f32 %v680, %v686
        %v693 = vadd.f32 %v681, %v687
        %v694 = vadd.f32 %v682, %v688
        %v695 = vadd.f32 %v683, %v689
        %v696 = vadd.f32 %v684, %v690
        %v697 = vrsqrt.pop %v691
        %v698 = vmul.f32 %v691, %v697
        %vm699 = vcmp.eq.f32.partialorder %v691, inf
        %v700 = vsel %vm699, %v691, %v698
        %vm701 = vcmp.eq.f32.partialorder %v691, 0.0
        %v702 = vand.u32 %v691, 2147483648
        %v703 = vsel %vm701, %v702, %v700
        %v704 = vrsqrt.pop %v692
        %v705 = vmul.f32 %v692, %v704
        %vm706 = vcmp.eq.f32.partialorder %v692, inf
        %v707 = vsel %vm706, %v692, %v705
        %vm708 = vcmp.eq.f32.partialorder %v692, 0.0
        %v709 = vand.u32 %v692, 2147483648
        %v710 = vsel %vm708, %v709, %v707
        %v711 = vrsqrt.pop %v693
        %v712 = vmul.f32 %v693, %v711
        %vm713 = vcmp.eq.f32.partialorder %v693, inf
        %v714 = vsel %vm713, %v693, %v712
        %vm715 = vcmp.eq.f32.partialorder %v693, 0.0
        %v716 = vand.u32 %v693, 2147483648
        %v717 = vsel %vm715, %v716, %v714
        %v718 = vrsqrt.pop %v694
        %v719 = vmul.f32 %v694, %v718
        %vm720 = vcmp.eq.f32.partialorder %v694, inf
        %v721 = vsel %vm720, %v694, %v719
        %vm722 = vcmp.eq.f32.partialorder %v694, 0.0
        %v723 = vand.u32 %v694, 2147483648
        %v724 = vsel %vm722, %v723, %v721
        %v725 = vrsqrt.pop %v695
        %v726 = vmul.f32 %v695, %v725
        %vm727 = vcmp.eq.f32.partialorder %v695, inf
        %v728 = vsel %vm727, %v695, %v726
        %vm729 = vcmp.eq.f32.partialorder %v695, 0.0
        %v730 = vand.u32 %v695, 2147483648
        %v731 = vsel %vm729, %v730, %v728
        %v732 = vrsqrt.pop %v696
        %v733 = vmul.f32 %v696, %v732
        %vm734 = vcmp.eq.f32.partialorder %v696, inf
        %v735 = vsel %vm734, %v696, %v733
        %vm736 = vcmp.eq.f32.partialorder %v696, 0.0
        %v737 = vand.u32 %v696, 2147483648
        %v738 = vsel %vm736, %v737, %v735
        %v739 = vmax.f32 %v703, %v710
        %740 = vmax.xlane.f32.xlu0 %v739
        %v741 = vpop.xlane.xlu0 %740
        %v742 = vmax.f32 %v717, %v724
        %743 = vmax.xlane.f32.xlu0 %v742
        %v744 = vpop.xlane.xlu0 %743
        %v745 = vmax.f32 %v731, %v738
        %746 = vmax.xlane.f32.xlu0 %v745
        %v747 = vpop.xlane.xlu0 %746
        %v748 = vrcp.pop %v741
        %v749 = vrcp.pop %v744
        %v750 = vrcp.pop %v747
        %v751 = vmul.f32 %v741, %v748
        %v752 = vmul.f32 %v744, %v749
        %v753 = vmul.f32 %v747, %v750
        %v754 = vsub.f32 2.0, %v751
        %v755 = vsub.f32 2.0, %v752
        %v756 = vsub.f32 2.0, %v753
        %v757 = vmul.f32 %v748, %v754
        %v758 = vmul.f32 %v749, %v755
        %v759 = vmul.f32 %v750, %v756
        %v760 = vmul.f32 %v703, %v757
        %v761 = vmul.f32 %v710, %v757
        %v762 = vmul.f32 %v717, %v758
        %v763 = vmul.f32 %v724, %v758
        %v764 = vmul.f32 %v731, %v759
        %v765 = vmul.f32 %v738, %v759
        %v766 = vld [vmem:[%s4] sm:$0xff]
        %v767 = vld [vmem:[%s4 + $0x8] sm:$0xff]
        %v768 = vld [vmem:[%s4 + $0x10] sm:$0xff]
        %v769 = vld [vmem:[%s4 + $0x18] sm:$0xff]
        %v770 = vld [vmem:[%s5] sm:$0xff]
        %v771 = vld [vmem:[%s5 + $0x8] sm:$0xff]
        %v772 = vld [vmem:[%s5 + $0x10] sm:$0xff]
        %v773 = vld [vmem:[%s5 + $0x18] sm:$0xff]
        %v774 = vld [vmem:[%s6] sm:$0xff]
        %v775 = vld [vmem:[%s6 + $0x8] sm:$0xff]
        %v776 = vld [vmem:[%s6 + $0x10] sm:$0xff]
        %v777 = vld [vmem:[%s6 + $0x18] sm:$0xff]
        %v778 = vld [vmem:[%s7] sm:$0x1]
        %780 = vset.pattern.permute.xlu0 0
        %781 = vperm.xlu0 %780, %v766
        %v782 = vpop.permute.xlu0 %781
        %785 = vset.pattern.permute.xlu0 0
        %786 = vperm.xlu0 %785, %v767
        %v787 = vpop.permute.xlu0 %786
        %790 = vset.pattern.permute.xlu0 0
        %791 = vperm.xlu0 %790, %v768
        %v792 = vpop.permute.xlu0 %791
        %795 = vset.pattern.permute.xlu0 0
        %796 = vperm.xlu0 %795, %v769
        %v797 = vpop.permute.xlu0 %796
        %v799 = vlaneseq
        %v800 = vshrl.u32 %v799, 7
        %v801 = vsub.s32 0, %v800
        %v802 = vrot.slane %v760, %v801
        %v803 = vlaneseq
        %v804 = vshrl.u32 %v803, 7
        %v805 = vsub.s32 0, %v804
        %v806 = vrot.slane %v761, %v805
        %v807 = vmul.f32 %v782, %v802
        %v808 = vmul.f32 %v782, %v806
        %v809 = vmul.f32 %v787, %v802
        %v810 = vmul.f32 %v787, %v806
        %v811 = vmul.f32 %v792, %v802
        %v812 = vmul.f32 %v792, %v806
        %v813 = vmul.f32 %v797, %v802
        %v814 = vmul.f32 %v797, %v806
        %815 = vset.pattern.permute.xlu0 1
        %816 = vperm.xlu0 %815, %v766
        %v817 = vpop.permute.xlu0 %816
        %819 = vset.pattern.permute.xlu0 1
        %820 = vperm.xlu0 %819, %v767
        %v821 = vpop.permute.xlu0 %820
        %823 = vset.pattern.permute.xlu0 1
        %824 = vperm.xlu0 %823, %v768
        %v825 = vpop.permute.xlu0 %824
        %827 = vset.pattern.permute.xlu0 1
        %828 = vperm.xlu0 %827, %v769
        %v829 = vpop.permute.xlu0 %828
        %v831 = vlaneseq
        %v832 = vshrl.u32 %v831, 7
        %v833 = vsub.s32 1, %v832
        %v834 = vrot.slane %v760, %v833
        %v835 = vlaneseq
        %v836 = vshrl.u32 %v835, 7
        %v837 = vsub.s32 1, %v836
        %v838 = vrot.slane %v761, %v837
        %v839 = vmul.f32 %v817, %v834
        %v840 = vmul.f32 %v817, %v838
        %v841 = vmul.f32 %v821, %v834
        %v842 = vmul.f32 %v821, %v838
        %v843 = vmul.f32 %v825, %v834
        %v844 = vmul.f32 %v825, %v838
        %v845 = vmul.f32 %v829, %v834
        %v846 = vmul.f32 %v829, %v838
        %v847 = vadd.f32 %v807, %v839
        %v848 = vadd.f32 %v808, %v840
        %v849 = vadd.f32 %v809, %v841
        %v850 = vadd.f32 %v810, %v842
        %v851 = vadd.f32 %v811, %v843
        %v852 = vadd.f32 %v812, %v844
        %v853 = vadd.f32 %v813, %v845
        %v854 = vadd.f32 %v814, %v846
        %855 = vset.pattern.permute.xlu0 2
        %856 = vperm.xlu0 %855, %v766
        %v857 = vpop.permute.xlu0 %856
        %859 = vset.pattern.permute.xlu0 2
        %860 = vperm.xlu0 %859, %v767
        %v861 = vpop.permute.xlu0 %860
        %863 = vset.pattern.permute.xlu0 2
        %864 = vperm.xlu0 %863, %v768
        %v865 = vpop.permute.xlu0 %864
        %867 = vset.pattern.permute.xlu0 2
        %868 = vperm.xlu0 %867, %v769
        %v869 = vpop.permute.xlu0 %868
        %v871 = vlaneseq
        %v872 = vshrl.u32 %v871, 7
        %v873 = vsub.s32 2, %v872
        %v874 = vrot.slane %v760, %v873
        %v875 = vlaneseq
        %v876 = vshrl.u32 %v875, 7
        %v877 = vsub.s32 2, %v876
        %v878 = vrot.slane %v761, %v877
        %v879 = vmul.f32 %v857, %v874
        %v880 = vmul.f32 %v857, %v878
        %v881 = vmul.f32 %v861, %v874
        %v882 = vmul.f32 %v861, %v878
        %v883 = vmul.f32 %v865, %v874
        %v884 = vmul.f32 %v865, %v878
        %v885 = vmul.f32 %v869, %v874
        %v886 = vmul.f32 %v869, %v878
        %v887 = vadd.f32 %v847, %v879
        %v888 = vadd.f32 %v848, %v880
        %v889 = vadd.f32 %v849, %v881
        %v890 = vadd.f32 %v850, %v882
        %v891 = vadd.f32 %v851, %v883
        %v892 = vadd.f32 %v852, %v884
        %v893 = vadd.f32 %v853, %v885
        %v894 = vadd.f32 %v854, %v886
        %896 = vset.pattern.permute.xlu0 0
        %897 = vperm.xlu0 %896, %v770
        %v898 = vpop.permute.xlu0 %897
        %901 = vset.pattern.permute.xlu0 0
        %902 = vperm.xlu0 %901, %v771
        %v903 = vpop.permute.xlu0 %902
        %906 = vset.pattern.permute.xlu0 0
        %907 = vperm.xlu0 %906, %v772
        %v908 = vpop.permute.xlu0 %907
        %911 = vset.pattern.permute.xlu0 0
        %912 = vperm.xlu0 %911, %v773
        %v913 = vpop.permute.xlu0 %912
        %v915 = vadd.f32 %v887, %v898
        %v916 = vadd.f32 %v888, %v898
        %v917 = vadd.f32 %v889, %v903
        %v918 = vadd.f32 %v890, %v903
        %v919 = vadd.f32 %v891, %v908
        %v920 = vadd.f32 %v892, %v908
        %v921 = vadd.f32 %v893, %v913
        %v922 = vadd.f32 %v894, %v913
        %v923 = vmax.f32 %v915, 0.0
        %v924 = vmax.f32 %v916, 0.0
        %v925 = vmax.f32 %v917, 0.0
        %v926 = vmax.f32 %v918, 0.0
        %v927 = vmax.f32 %v919, 0.0
        %v928 = vmax.f32 %v920, 0.0
        %v929 = vmax.f32 %v921, 0.0
        %v930 = vmax.f32 %v922, 0.0
        %v931 = vadd.f32 %v923, %v924
        %932 = vadd.xlane.f32.xlu0 %v931
        %v933 = vpop.xlane.xlu0 %932
        %v934 = vadd.f32 %v925, %v926
        %935 = vadd.xlane.f32.xlu0 %v934
        %v936 = vpop.xlane.xlu0 %935
        %v937 = vadd.f32 %v927, %v928
        %938 = vadd.xlane.f32.xlu0 %v937
        %v939 = vpop.xlane.xlu0 %938
        %v940 = vadd.f32 %v929, %v930
        %941 = vadd.xlane.f32.xlu0 %v940
        %v942 = vpop.xlane.xlu0 %941
        %v943 = vmul.f32 %v933, 0.00390625
        %v944 = vmul.f32 %v936, 0.00390625
        %v945 = vmul.f32 %v939, 0.00390625
        %v946 = vmul.f32 %v942, 0.00390625
        %v947 = vmul.f32 %v943, %v774
        %v948 = vmul.f32 %v944, %v775
        %v949 = vmul.f32 %v945, %v776
        %v950 = vmul.f32 %v946, %v777
        %v951 = vadd.f32 %v947, %v948
        %v952 = vadd.f32 %v951, %v949
        %v953 = vadd.f32 %v952, %v950
        %v954 = vrot.slane %v953, 4
        %v955 = vadd.f32 %v953, %v954
        %v956 = vrot.slane %v955, 2
        %v957 = vadd.f32 %v955, %v956
        %v958 = vrot.slane %v957, 1
        %v959 = vadd.f32 %v957, %v958
        %v960 = vadd.f32 %v959, %v778
        %v961 = vmax.f32 %v960, 0.0
        %v962 = vlaneseq
        %v963 = vshrl.u32 %v962, 7
        %v964 = vsub.s32 3, %v963
        %v965 = vrot.slane %v760, %v964
        %v966 = vlaneseq
        %v967 = vshrl.u32 %v966, 7
        %v968 = vsub.s32 3, %v967
        %v969 = vrot.slane %v761, %v968
        %v970 = vmul.f32 %v782, %v965
        %v971 = vmul.f32 %v782, %v969
        %v972 = vmul.f32 %v787, %v965
        %v973 = vmul.f32 %v787, %v969
        %v974 = vmul.f32 %v792, %v965
        %v975 = vmul.f32 %v792, %v969
        %v976 = vmul.f32 %v797, %v965
        %v977 = vmul.f32 %v797, %v969
        %v978 = vlaneseq
        %v979 = vshrl.u32 %v978, 7
        %v980 = vsub.s32 4, %v979
        %v981 = vrot.slane %v760, %v980
        %v982 = vlaneseq
        %v983 = vshrl.u32 %v982, 7
        %v984 = vsub.s32 4, %v983
        %v985 = vrot.slane %v761, %v984
        %v986 = vmul.f32 %v817, %v981
        %v987 = vmul.f32 %v817, %v985
        %v988 = vmul.f32 %v821, %v981
        %v989 = vmul.f32 %v821, %v985
        %v990 = vmul.f32 %v825, %v981
        %v991 = vmul.f32 %v825, %v985
        %v992 = vmul.f32 %v829, %v981
        %v993 = vmul.f32 %v829, %v985
        %v994 = vadd.f32 %v970, %v986
        %v995 = vadd.f32 %v971, %v987
        %v996 = vadd.f32 %v972, %v988
        %v997 = vadd.f32 %v973, %v989
        %v998 = vadd.f32 %v974, %v990
        %v999 = vadd.f32 %v975, %v991
        %v1000 = vadd.f32 %v976, %v992
        %v1001 = vadd.f32 %v977, %v993
        %v1002 = vlaneseq
        %v1003 = vshrl.u32 %v1002, 7
        %v1004 = vsub.s32 5, %v1003
        %v1005 = vrot.slane %v760, %v1004
        %v1006 = vlaneseq
        %v1007 = vshrl.u32 %v1006, 7
        %v1008 = vsub.s32 5, %v1007
        %v1009 = vrot.slane %v761, %v1008
        %v1010 = vmul.f32 %v857, %v1005
        %v1011 = vmul.f32 %v857, %v1009
        %v1012 = vmul.f32 %v861, %v1005
        %v1013 = vmul.f32 %v861, %v1009
        %v1014 = vmul.f32 %v865, %v1005
        %v1015 = vmul.f32 %v865, %v1009
        %v1016 = vmul.f32 %v869, %v1005
        %v1017 = vmul.f32 %v869, %v1009
        %v1018 = vadd.f32 %v994, %v1010
        %v1019 = vadd.f32 %v995, %v1011
        %v1020 = vadd.f32 %v996, %v1012
        %v1021 = vadd.f32 %v997, %v1013
        %v1022 = vadd.f32 %v998, %v1014
        %v1023 = vadd.f32 %v999, %v1015
        %v1024 = vadd.f32 %v1000, %v1016
        %v1025 = vadd.f32 %v1001, %v1017
        %v1026 = vadd.f32 %v1018, %v898
        %v1027 = vadd.f32 %v1019, %v898
        %v1028 = vadd.f32 %v1020, %v903
        %v1029 = vadd.f32 %v1021, %v903
        %v1030 = vadd.f32 %v1022, %v908
        %v1031 = vadd.f32 %v1023, %v908
        %v1032 = vadd.f32 %v1024, %v913
        %v1033 = vadd.f32 %v1025, %v913
        %v1034 = vmax.f32 %v1026, 0.0
        %v1035 = vmax.f32 %v1027, 0.0
        %v1036 = vmax.f32 %v1028, 0.0
        %v1037 = vmax.f32 %v1029, 0.0
        %v1038 = vmax.f32 %v1030, 0.0
        %v1039 = vmax.f32 %v1031, 0.0
        %v1040 = vmax.f32 %v1032, 0.0
        %v1041 = vmax.f32 %v1033, 0.0
        %v1042 = vadd.f32 %v1034, %v1035
        %1043 = vadd.xlane.f32.xlu0 %v1042
        %v1044 = vpop.xlane.xlu0 %1043
        %v1045 = vadd.f32 %v1036, %v1037
        %1046 = vadd.xlane.f32.xlu0 %v1045
        %v1047 = vpop.xlane.xlu0 %1046
        %v1048 = vadd.f32 %v1038, %v1039
        %1049 = vadd.xlane.f32.xlu0 %v1048
        %v1050 = vpop.xlane.xlu0 %1049
        %v1051 = vadd.f32 %v1040, %v1041
        %1052 = vadd.xlane.f32.xlu0 %v1051
        %v1053 = vpop.xlane.xlu0 %1052
        %v1054 = vmul.f32 %v1044, 0.00390625
        %v1055 = vmul.f32 %v1047, 0.00390625
        %v1056 = vmul.f32 %v1050, 0.00390625
        %v1057 = vmul.f32 %v1053, 0.00390625
        %v1058 = vmul.f32 %v1054, %v774
        %v1059 = vmul.f32 %v1055, %v775
        %v1060 = vmul.f32 %v1056, %v776
        %v1061 = vmul.f32 %v1057, %v777
        %v1062 = vadd.f32 %v1058, %v1059
        %v1063 = vadd.f32 %v1062, %v1060
        %v1064 = vadd.f32 %v1063, %v1061
        %v1065 = vrot.slane %v1064, 4
        %v1066 = vadd.f32 %v1064, %v1065
        %v1067 = vrot.slane %v1066, 2
        %v1068 = vadd.f32 %v1066, %v1067
        %v1069 = vrot.slane %v1068, 1
        %v1070 = vadd.f32 %v1068, %v1069
        %v1071 = vadd.f32 %v1070, %v778
        %v1072 = vmax.f32 %v1071, 0.0
        %v1073 = vlaneseq
        %v1074 = vshrl.u32 %v1073, 7
        %v1075 = vsub.s32 6, %v1074
        %v1076 = vrot.slane %v760, %v1075
        %v1077 = vlaneseq
        %v1078 = vshrl.u32 %v1077, 7
        %v1079 = vsub.s32 6, %v1078
        %v1080 = vrot.slane %v761, %v1079
        %v1081 = vmul.f32 %v782, %v1076
        %v1082 = vmul.f32 %v782, %v1080
        %v1083 = vmul.f32 %v787, %v1076
        %v1084 = vmul.f32 %v787, %v1080
        %v1085 = vmul.f32 %v792, %v1076
        %v1086 = vmul.f32 %v792, %v1080
        %v1087 = vmul.f32 %v797, %v1076
        %v1088 = vmul.f32 %v797, %v1080
        %v1089 = vlaneseq
        %v1090 = vshrl.u32 %v1089, 7
        %v1091 = vsub.s32 7, %v1090
        %v1092 = vrot.slane %v760, %v1091
        %v1093 = vlaneseq
        %v1094 = vshrl.u32 %v1093, 7
        %v1095 = vsub.s32 7, %v1094
        %v1096 = vrot.slane %v761, %v1095
        %v1097 = vmul.f32 %v817, %v1092
        %v1098 = vmul.f32 %v817, %v1096
        %v1099 = vmul.f32 %v821, %v1092
        %v1100 = vmul.f32 %v821, %v1096
        %v1101 = vmul.f32 %v825, %v1092
        %v1102 = vmul.f32 %v825, %v1096
        %v1103 = vmul.f32 %v829, %v1092
        %v1104 = vmul.f32 %v829, %v1096
        %v1105 = vadd.f32 %v1081, %v1097
        %v1106 = vadd.f32 %v1082, %v1098
        %v1107 = vadd.f32 %v1083, %v1099
        %v1108 = vadd.f32 %v1084, %v1100
        %v1109 = vadd.f32 %v1085, %v1101
        %v1110 = vadd.f32 %v1086, %v1102
        %v1111 = vadd.f32 %v1087, %v1103
        %v1112 = vadd.f32 %v1088, %v1104
        %v1113 = vlaneseq
        %v1114 = vshrl.u32 %v1113, 7
        %v1115 = vsub.s32 0, %v1114
        %v1116 = vrot.slane %v762, %v1115
        %v1117 = vlaneseq
        %v1118 = vshrl.u32 %v1117, 7
        %v1119 = vsub.s32 0, %v1118
        %v1120 = vrot.slane %v763, %v1119
        %v1121 = vmul.f32 %v857, %v1116
        %v1122 = vmul.f32 %v857, %v1120
        %v1123 = vmul.f32 %v861, %v1116
        %v1124 = vmul.f32 %v861, %v1120
        %v1125 = vmul.f32 %v865, %v1116
        %v1126 = vmul.f32 %v865, %v1120
        %v1127 = vmul.f32 %v869, %v1116
        %v1128 = vmul.f32 %v869, %v1120
        %v1129 = vadd.f32 %v1105, %v1121
        %v1130 = vadd.f32 %v1106, %v1122
        %v1131 = vadd.f32 %v1107, %v1123
        %v1132 = vadd.f32 %v1108, %v1124
        %v1133 = vadd.f32 %v1109, %v1125
        %v1134 = vadd.f32 %v1110, %v1126
        %v1135 = vadd.f32 %v1111, %v1127
        %v1136 = vadd.f32 %v1112, %v1128
        %v1137 = vadd.f32 %v1129, %v898
        %v1138 = vadd.f32 %v1130, %v898
        %v1139 = vadd.f32 %v1131, %v903
        %v1140 = vadd.f32 %v1132, %v903
        %v1141 = vadd.f32 %v1133, %v908
        %v1142 = vadd.f32 %v1134, %v908
        %v1143 = vadd.f32 %v1135, %v913
        %v1144 = vadd.f32 %v1136, %v913
        %v1145 = vmax.f32 %v1137, 0.0
        %v1146 = vmax.f32 %v1138, 0.0
        %v1147 = vmax.f32 %v1139, 0.0
        %v1148 = vmax.f32 %v1140, 0.0
        %v1149 = vmax.f32 %v1141, 0.0
        %v1150 = vmax.f32 %v1142, 0.0
        %v1151 = vmax.f32 %v1143, 0.0
        %v1152 = vmax.f32 %v1144, 0.0
        %v1153 = vadd.f32 %v1145, %v1146
        %1154 = vadd.xlane.f32.xlu0 %v1153
        %v1155 = vpop.xlane.xlu0 %1154
        %v1156 = vadd.f32 %v1147, %v1148
        %1157 = vadd.xlane.f32.xlu0 %v1156
        %v1158 = vpop.xlane.xlu0 %1157
        %v1159 = vadd.f32 %v1149, %v1150
        %1160 = vadd.xlane.f32.xlu0 %v1159
        %v1161 = vpop.xlane.xlu0 %1160
        %v1162 = vadd.f32 %v1151, %v1152
        %1163 = vadd.xlane.f32.xlu0 %v1162
        %v1164 = vpop.xlane.xlu0 %1163
        %v1165 = vmul.f32 %v1155, 0.00390625
        %v1166 = vmul.f32 %v1158, 0.00390625
        %v1167 = vmul.f32 %v1161, 0.00390625
        %v1168 = vmul.f32 %v1164, 0.00390625
        %v1169 = vmul.f32 %v1165, %v774
        %v1170 = vmul.f32 %v1166, %v775
        %v1171 = vmul.f32 %v1167, %v776
        %v1172 = vmul.f32 %v1168, %v777
        %v1173 = vadd.f32 %v1169, %v1170
        %v1174 = vadd.f32 %v1173, %v1171
        %v1175 = vadd.f32 %v1174, %v1172
        %v1176 = vrot.slane %v1175, 4
        %v1177 = vadd.f32 %v1175, %v1176
        %v1178 = vrot.slane %v1177, 2
        %v1179 = vadd.f32 %v1177, %v1178
        %v1180 = vrot.slane %v1179, 1
        %v1181 = vadd.f32 %v1179, %v1180
        %v1182 = vadd.f32 %v1181, %v778
        %v1183 = vmax.f32 %v1182, 0.0
        %v1184 = vlaneseq
        %v1185 = vshrl.u32 %v1184, 7
        %v1186 = vsub.s32 1, %v1185
        %v1187 = vrot.slane %v762, %v1186
        %v1188 = vlaneseq
        %v1189 = vshrl.u32 %v1188, 7
        %v1190 = vsub.s32 1, %v1189
        %v1191 = vrot.slane %v763, %v1190
        %v1192 = vmul.f32 %v782, %v1187
        %v1193 = vmul.f32 %v782, %v1191
        %v1194 = vmul.f32 %v787, %v1187
        %v1195 = vmul.f32 %v787, %v1191
        %v1196 = vmul.f32 %v792, %v1187
        %v1197 = vmul.f32 %v792, %v1191
        %v1198 = vmul.f32 %v797, %v1187
        %v1199 = vmul.f32 %v797, %v1191
        %v1200 = vlaneseq
        %v1201 = vshrl.u32 %v1200, 7
        %v1202 = vsub.s32 2, %v1201
        %v1203 = vrot.slane %v762, %v1202
        %v1204 = vlaneseq
        %v1205 = vshrl.u32 %v1204, 7
        %v1206 = vsub.s32 2, %v1205
        %v1207 = vrot.slane %v763, %v1206
        %v1208 = vmul.f32 %v817, %v1203
        %v1209 = vmul.f32 %v817, %v1207
        %v1210 = vmul.f32 %v821, %v1203
        %v1211 = vmul.f32 %v821, %v1207
        %v1212 = vmul.f32 %v825, %v1203
        %v1213 = vmul.f32 %v825, %v1207
        %v1214 = vmul.f32 %v829, %v1203
        %v1215 = vmul.f32 %v829, %v1207
        %v1216 = vadd.f32 %v1192, %v1208
        %v1217 = vadd.f32 %v1193, %v1209
        %v1218 = vadd.f32 %v1194, %v1210
        %v1219 = vadd.f32 %v1195, %v1211
        %v1220 = vadd.f32 %v1196, %v1212
        %v1221 = vadd.f32 %v1197, %v1213
        %v1222 = vadd.f32 %v1198, %v1214
        %v1223 = vadd.f32 %v1199, %v1215
        %v1224 = vlaneseq
        %v1225 = vshrl.u32 %v1224, 7
        %v1226 = vsub.s32 3, %v1225
        %v1227 = vrot.slane %v762, %v1226
        %v1228 = vlaneseq
        %v1229 = vshrl.u32 %v1228, 7
        %v1230 = vsub.s32 3, %v1229
        %v1231 = vrot.slane %v763, %v1230
        %v1232 = vmul.f32 %v857, %v1227
        %v1233 = vmul.f32 %v857, %v1231
        %v1234 = vmul.f32 %v861, %v1227
        %v1235 = vmul.f32 %v861, %v1231
        %v1236 = vmul.f32 %v865, %v1227
        %v1237 = vmul.f32 %v865, %v1231
        %v1238 = vmul.f32 %v869, %v1227
        %v1239 = vmul.f32 %v869, %v1231
        %v1240 = vadd.f32 %v1216, %v1232
        %v1241 = vadd.f32 %v1217, %v1233
        %v1242 = vadd.f32 %v1218, %v1234
        %v1243 = vadd.f32 %v1219, %v1235
        %v1244 = vadd.f32 %v1220, %v1236
        %v1245 = vadd.f32 %v1221, %v1237
        %v1246 = vadd.f32 %v1222, %v1238
        %v1247 = vadd.f32 %v1223, %v1239
        %v1248 = vadd.f32 %v1240, %v898
        %v1249 = vadd.f32 %v1241, %v898
        %v1250 = vadd.f32 %v1242, %v903
        %v1251 = vadd.f32 %v1243, %v903
        %v1252 = vadd.f32 %v1244, %v908
        %v1253 = vadd.f32 %v1245, %v908
        %v1254 = vadd.f32 %v1246, %v913
        %v1255 = vadd.f32 %v1247, %v913
        %v1256 = vmax.f32 %v1248, 0.0
        %v1257 = vmax.f32 %v1249, 0.0
        %v1258 = vmax.f32 %v1250, 0.0
        %v1259 = vmax.f32 %v1251, 0.0
        %v1260 = vmax.f32 %v1252, 0.0
        %v1261 = vmax.f32 %v1253, 0.0
        %v1262 = vmax.f32 %v1254, 0.0
        %v1263 = vmax.f32 %v1255, 0.0
        %v1264 = vadd.f32 %v1256, %v1257
        %1265 = vadd.xlane.f32.xlu0 %v1264
        %v1266 = vpop.xlane.xlu0 %1265
        %v1267 = vadd.f32 %v1258, %v1259
        %1268 = vadd.xlane.f32.xlu0 %v1267
        %v1269 = vpop.xlane.xlu0 %1268
        %v1270 = vadd.f32 %v1260, %v1261
        %1271 = vadd.xlane.f32.xlu0 %v1270
        %v1272 = vpop.xlane.xlu0 %1271
        %v1273 = vadd.f32 %v1262, %v1263
        %1274 = vadd.xlane.f32.xlu0 %v1273
        %v1275 = vpop.xlane.xlu0 %1274
        %v1276 = vmul.f32 %v1266, 0.00390625
        %v1277 = vmul.f32 %v1269, 0.00390625
        %v1278 = vmul.f32 %v1272, 0.00390625
        %v1279 = vmul.f32 %v1275, 0.00390625
        %v1280 = vmul.f32 %v1276, %v774
        %v1281 = vmul.f32 %v1277, %v775
        %v1282 = vmul.f32 %v1278, %v776
        %v1283 = vmul.f32 %v1279, %v777
        %v1284 = vadd.f32 %v1280, %v1281
        %v1285 = vadd.f32 %v1284, %v1282
        %v1286 = vadd.f32 %v1285, %v1283
        %v1287 = vrot.slane %v1286, 4
        %v1288 = vadd.f32 %v1286, %v1287
        %v1289 = vrot.slane %v1288, 2
        %v1290 = vadd.f32 %v1288, %v1289
        %v1291 = vrot.slane %v1290, 1
        %v1292 = vadd.f32 %v1290, %v1291
        %v1293 = vadd.f32 %v1292, %v778
        %v1294 = vmax.f32 %v1293, 0.0
        %v1295 = vlaneseq
        %v1296 = vshrl.u32 %v1295, 7
        %v1297 = vsub.s32 4, %v1296
        %v1298 = vrot.slane %v762, %v1297
        %v1299 = vlaneseq
        %v1300 = vshrl.u32 %v1299, 7
        %v1301 = vsub.s32 4, %v1300
        %v1302 = vrot.slane %v763, %v1301
        %v1303 = vmul.f32 %v782, %v1298
        %v1304 = vmul.f32 %v782, %v1302
        %v1305 = vmul.f32 %v787, %v1298
        %v1306 = vmul.f32 %v787, %v1302
        %v1307 = vmul.f32 %v792, %v1298
        %v1308 = vmul.f32 %v792, %v1302
        %v1309 = vmul.f32 %v797, %v1298
        %v1310 = vmul.f32 %v797, %v1302
        %v1311 = vlaneseq
        %v1312 = vshrl.u32 %v1311, 7
        %v1313 = vsub.s32 5, %v1312
        %v1314 = vrot.slane %v762, %v1313
        %v1315 = vlaneseq
        %v1316 = vshrl.u32 %v1315, 7
        %v1317 = vsub.s32 5, %v1316
        %v1318 = vrot.slane %v763, %v1317
        %v1319 = vmul.f32 %v817, %v1314
        %v1320 = vmul.f32 %v817, %v1318
        %v1321 = vmul.f32 %v821, %v1314
        %v1322 = vmul.f32 %v821, %v1318
        %v1323 = vmul.f32 %v825, %v1314
        %v1324 = vmul.f32 %v825, %v1318
        %v1325 = vmul.f32 %v829, %v1314
        %v1326 = vmul.f32 %v829, %v1318
        %v1327 = vadd.f32 %v1303, %v1319
        %v1328 = vadd.f32 %v1304, %v1320
        %v1329 = vadd.f32 %v1305, %v1321
        %v1330 = vadd.f32 %v1306, %v1322
        %v1331 = vadd.f32 %v1307, %v1323
        %v1332 = vadd.f32 %v1308, %v1324
        %v1333 = vadd.f32 %v1309, %v1325
        %v1334 = vadd.f32 %v1310, %v1326
        %v1335 = vlaneseq
        %v1336 = vshrl.u32 %v1335, 7
        %v1337 = vsub.s32 6, %v1336
        %v1338 = vrot.slane %v762, %v1337
        %v1339 = vlaneseq
        %v1340 = vshrl.u32 %v1339, 7
        %v1341 = vsub.s32 6, %v1340
        %v1342 = vrot.slane %v763, %v1341
        %v1343 = vmul.f32 %v857, %v1338
        %v1344 = vmul.f32 %v857, %v1342
        %v1345 = vmul.f32 %v861, %v1338
        %v1346 = vmul.f32 %v861, %v1342
        %v1347 = vmul.f32 %v865, %v1338
        %v1348 = vmul.f32 %v865, %v1342
        %v1349 = vmul.f32 %v869, %v1338
        %v1350 = vmul.f32 %v869, %v1342
        %v1351 = vadd.f32 %v1327, %v1343
        %v1352 = vadd.f32 %v1328, %v1344
        %v1353 = vadd.f32 %v1329, %v1345
        %v1354 = vadd.f32 %v1330, %v1346
        %v1355 = vadd.f32 %v1331, %v1347
        %v1356 = vadd.f32 %v1332, %v1348
        %v1357 = vadd.f32 %v1333, %v1349
        %v1358 = vadd.f32 %v1334, %v1350
        %v1359 = vadd.f32 %v1351, %v898
        %v1360 = vadd.f32 %v1352, %v898
        %v1361 = vadd.f32 %v1353, %v903
        %v1362 = vadd.f32 %v1354, %v903
        %v1363 = vadd.f32 %v1355, %v908
        %v1364 = vadd.f32 %v1356, %v908
        %v1365 = vadd.f32 %v1357, %v913
        %v1366 = vadd.f32 %v1358, %v913
        %v1367 = vmax.f32 %v1359, 0.0
        %v1368 = vmax.f32 %v1360, 0.0
        %v1369 = vmax.f32 %v1361, 0.0
        %v1370 = vmax.f32 %v1362, 0.0
        %v1371 = vmax.f32 %v1363, 0.0
        %v1372 = vmax.f32 %v1364, 0.0
        %v1373 = vmax.f32 %v1365, 0.0
        %v1374 = vmax.f32 %v1366, 0.0
        %v1375 = vadd.f32 %v1367, %v1368
        %1376 = vadd.xlane.f32.xlu0 %v1375
        %v1377 = vpop.xlane.xlu0 %1376
        %v1378 = vadd.f32 %v1369, %v1370
        %1379 = vadd.xlane.f32.xlu0 %v1378
        %v1380 = vpop.xlane.xlu0 %1379
        %v1381 = vadd.f32 %v1371, %v1372
        %1382 = vadd.xlane.f32.xlu0 %v1381
        %v1383 = vpop.xlane.xlu0 %1382
        %v1384 = vadd.f32 %v1373, %v1374
        %1385 = vadd.xlane.f32.xlu0 %v1384
        %v1386 = vpop.xlane.xlu0 %1385
        %v1387 = vmul.f32 %v1377, 0.00390625
        %v1388 = vmul.f32 %v1380, 0.00390625
        %v1389 = vmul.f32 %v1383, 0.00390625
        %v1390 = vmul.f32 %v1386, 0.00390625
        %v1391 = vmul.f32 %v1387, %v774
        %v1392 = vmul.f32 %v1388, %v775
        %v1393 = vmul.f32 %v1389, %v776
        %v1394 = vmul.f32 %v1390, %v777
        %v1395 = vadd.f32 %v1391, %v1392
        %v1396 = vadd.f32 %v1395, %v1393
        %v1397 = vadd.f32 %v1396, %v1394
        %v1398 = vrot.slane %v1397, 4
        %v1399 = vadd.f32 %v1397, %v1398
        %v1400 = vrot.slane %v1399, 2
        %v1401 = vadd.f32 %v1399, %v1400
        %v1402 = vrot.slane %v1401, 1
        %v1403 = vadd.f32 %v1401, %v1402
        %v1404 = vadd.f32 %v1403, %v778
        %v1405 = vmax.f32 %v1404, 0.0
        %v1406 = vlaneseq
        %v1407 = vshrl.u32 %v1406, 7
        %v1408 = vsub.s32 7, %v1407
        %v1409 = vrot.slane %v762, %v1408
        %v1410 = vlaneseq
        %v1411 = vshrl.u32 %v1410, 7
        %v1412 = vsub.s32 7, %v1411
        %v1413 = vrot.slane %v763, %v1412
        %v1414 = vmul.f32 %v782, %v1409
        %v1415 = vmul.f32 %v782, %v1413
        %v1416 = vmul.f32 %v787, %v1409
        %v1417 = vmul.f32 %v787, %v1413
        %v1418 = vmul.f32 %v792, %v1409
        %v1419 = vmul.f32 %v792, %v1413
        %v1420 = vmul.f32 %v797, %v1409
        %v1421 = vmul.f32 %v797, %v1413
        %v1422 = vlaneseq
        %v1423 = vshrl.u32 %v1422, 7
        %v1424 = vsub.s32 0, %v1423
        %v1425 = vrot.slane %v764, %v1424
        %v1426 = vlaneseq
        %v1427 = vshrl.u32 %v1426, 7
        %v1428 = vsub.s32 0, %v1427
        %v1429 = vrot.slane %v765, %v1428
        %v1430 = vmul.f32 %v817, %v1425
        %v1431 = vmul.f32 %v817, %v1429
        %v1432 = vmul.f32 %v821, %v1425
        %v1433 = vmul.f32 %v821, %v1429
        %v1434 = vmul.f32 %v825, %v1425
        %v1435 = vmul.f32 %v825, %v1429
        %v1436 = vmul.f32 %v829, %v1425
        %v1437 = vmul.f32 %v829, %v1429
        %v1438 = vadd.f32 %v1414, %v1430
        %v1439 = vadd.f32 %v1415, %v1431
        %v1440 = vadd.f32 %v1416, %v1432
        %v1441 = vadd.f32 %v1417, %v1433
        %v1442 = vadd.f32 %v1418, %v1434
        %v1443 = vadd.f32 %v1419, %v1435
        %v1444 = vadd.f32 %v1420, %v1436
        %v1445 = vadd.f32 %v1421, %v1437
        %v1446 = vlaneseq
        %v1447 = vshrl.u32 %v1446, 7
        %v1448 = vsub.s32 1, %v1447
        %v1449 = vrot.slane %v764, %v1448
        %v1450 = vlaneseq
        %v1451 = vshrl.u32 %v1450, 7
        %v1452 = vsub.s32 1, %v1451
        %v1453 = vrot.slane %v765, %v1452
        %v1454 = vmul.f32 %v857, %v1449
        %v1455 = vmul.f32 %v857, %v1453
        %v1456 = vmul.f32 %v861, %v1449
        %v1457 = vmul.f32 %v861, %v1453
        %v1458 = vmul.f32 %v865, %v1449
        %v1459 = vmul.f32 %v865, %v1453
        %v1460 = vmul.f32 %v869, %v1449
        %v1461 = vmul.f32 %v869, %v1453
        %v1462 = vadd.f32 %v1438, %v1454
        %v1463 = vadd.f32 %v1439, %v1455
        %v1464 = vadd.f32 %v1440, %v1456
        %v1465 = vadd.f32 %v1441, %v1457
        %v1466 = vadd.f32 %v1442, %v1458
        %v1467 = vadd.f32 %v1443, %v1459
        %v1468 = vadd.f32 %v1444, %v1460
        %v1469 = vadd.f32 %v1445, %v1461
        %v1470 = vadd.f32 %v1462, %v898
        %v1471 = vadd.f32 %v1463, %v898
        %v1472 = vadd.f32 %v1464, %v903
        %v1473 = vadd.f32 %v1465, %v903
        %v1474 = vadd.f32 %v1466, %v908
        %v1475 = vadd.f32 %v1467, %v908
        %v1476 = vadd.f32 %v1468, %v913
        %v1477 = vadd.f32 %v1469, %v913
        %v1478 = vmax.f32 %v1470, 0.0
        %v1479 = vmax.f32 %v1471, 0.0
        %v1480 = vmax.f32 %v1472, 0.0
        %v1481 = vmax.f32 %v1473, 0.0
        %v1482 = vmax.f32 %v1474, 0.0
        %v1483 = vmax.f32 %v1475, 0.0
        %v1484 = vmax.f32 %v1476, 0.0
        %v1485 = vmax.f32 %v1477, 0.0
        %v1486 = vadd.f32 %v1478, %v1479
        %1487 = vadd.xlane.f32.xlu0 %v1486
        %v1488 = vpop.xlane.xlu0 %1487
        %v1489 = vadd.f32 %v1480, %v1481
        %1490 = vadd.xlane.f32.xlu0 %v1489
        %v1491 = vpop.xlane.xlu0 %1490
        %v1492 = vadd.f32 %v1482, %v1483
        %1493 = vadd.xlane.f32.xlu0 %v1492
        %v1494 = vpop.xlane.xlu0 %1493
        %v1495 = vadd.f32 %v1484, %v1485
        %1496 = vadd.xlane.f32.xlu0 %v1495
        %v1497 = vpop.xlane.xlu0 %1496
        %v1498 = vmul.f32 %v1488, 0.00390625
        %v1499 = vmul.f32 %v1491, 0.00390625
        %v1500 = vmul.f32 %v1494, 0.00390625
        %v1501 = vmul.f32 %v1497, 0.00390625
        %v1502 = vmul.f32 %v1498, %v774
        %v1503 = vmul.f32 %v1499, %v775
        %v1504 = vmul.f32 %v1500, %v776
        %v1505 = vmul.f32 %v1501, %v777
        %v1506 = vadd.f32 %v1502, %v1503
        %v1507 = vadd.f32 %v1506, %v1504
        %v1508 = vadd.f32 %v1507, %v1505
        %v1509 = vrot.slane %v1508, 4
        %v1510 = vadd.f32 %v1508, %v1509
        %v1511 = vrot.slane %v1510, 2
        %v1512 = vadd.f32 %v1510, %v1511
        %v1513 = vrot.slane %v1512, 1
        %v1514 = vadd.f32 %v1512, %v1513
        %v1515 = vadd.f32 %v1514, %v778
        %v1516 = vmax.f32 %v1515, 0.0
        %v1517 = vlaneseq
        %v1518 = vshrl.u32 %v1517, 7
        %v1519 = vsub.s32 2, %v1518
        %v1520 = vrot.slane %v764, %v1519
        %v1521 = vlaneseq
        %v1522 = vshrl.u32 %v1521, 7
        %v1523 = vsub.s32 2, %v1522
        %v1524 = vrot.slane %v765, %v1523
        %v1525 = vmul.f32 %v782, %v1520
        %v1526 = vmul.f32 %v782, %v1524
        %v1527 = vmul.f32 %v787, %v1520
        %v1528 = vmul.f32 %v787, %v1524
        %v1529 = vmul.f32 %v792, %v1520
        %v1530 = vmul.f32 %v792, %v1524
        %v1531 = vmul.f32 %v797, %v1520
        %v1532 = vmul.f32 %v797, %v1524
        %v1533 = vlaneseq
        %v1534 = vshrl.u32 %v1533, 7
        %v1535 = vsub.s32 3, %v1534
        %v1536 = vrot.slane %v764, %v1535
        %v1537 = vlaneseq
        %v1538 = vshrl.u32 %v1537, 7
        %v1539 = vsub.s32 3, %v1538
        %v1540 = vrot.slane %v765, %v1539
        %v1541 = vmul.f32 %v817, %v1536
        %v1542 = vmul.f32 %v817, %v1540
        %v1543 = vmul.f32 %v821, %v1536
        %v1544 = vmul.f32 %v821, %v1540
        %v1545 = vmul.f32 %v825, %v1536
        %v1546 = vmul.f32 %v825, %v1540
        %v1547 = vmul.f32 %v829, %v1536
        %v1548 = vmul.f32 %v829, %v1540
        %v1549 = vadd.f32 %v1525, %v1541
        %v1550 = vadd.f32 %v1526, %v1542
        %v1551 = vadd.f32 %v1527, %v1543
        %v1552 = vadd.f32 %v1528, %v1544
        %v1553 = vadd.f32 %v1529, %v1545
        %v1554 = vadd.f32 %v1530, %v1546
        %v1555 = vadd.f32 %v1531, %v1547
        %v1556 = vadd.f32 %v1532, %v1548
        %v1557 = vlaneseq
        %v1558 = vshrl.u32 %v1557, 7
        %v1559 = vsub.s32 4, %v1558
        %v1560 = vrot.slane %v764, %v1559
        %v1561 = vlaneseq
        %v1562 = vshrl.u32 %v1561, 7
        %v1563 = vsub.s32 4, %v1562
        %v1564 = vrot.slane %v765, %v1563
        %v1565 = vmul.f32 %v857, %v1560
        %v1566 = vmul.f32 %v857, %v1564
        %v1567 = vmul.f32 %v861, %v1560
        %v1568 = vmul.f32 %v861, %v1564
        %v1569 = vmul.f32 %v865, %v1560
        %v1570 = vmul.f32 %v865, %v1564
        %v1571 = vmul.f32 %v869, %v1560
        %v1572 = vmul.f32 %v869, %v1564
        %v1573 = vadd.f32 %v1549, %v1565
        %v1574 = vadd.f32 %v1550, %v1566
        %v1575 = vadd.f32 %v1551, %v1567
        %v1576 = vadd.f32 %v1552, %v1568
        %v1577 = vadd.f32 %v1553, %v1569
        %v1578 = vadd.f32 %v1554, %v1570
        %v1579 = vadd.f32 %v1555, %v1571
        %v1580 = vadd.f32 %v1556, %v1572
        %v1581 = vadd.f32 %v1573, %v898
        %v1582 = vadd.f32 %v1574, %v898
        %v1583 = vadd.f32 %v1575, %v903
        %v1584 = vadd.f32 %v1576, %v903
        %v1585 = vadd.f32 %v1577, %v908
        %v1586 = vadd.f32 %v1578, %v908
        %v1587 = vadd.f32 %v1579, %v913
        %v1588 = vadd.f32 %v1580, %v913
        %v1589 = vmax.f32 %v1581, 0.0
        %v1590 = vmax.f32 %v1582, 0.0
        %v1591 = vmax.f32 %v1583, 0.0
        %v1592 = vmax.f32 %v1584, 0.0
        %v1593 = vmax.f32 %v1585, 0.0
        %v1594 = vmax.f32 %v1586, 0.0
        %v1595 = vmax.f32 %v1587, 0.0
        %v1596 = vmax.f32 %v1588, 0.0
        %v1597 = vadd.f32 %v1589, %v1590
        %1598 = vadd.xlane.f32.xlu0 %v1597
        %v1599 = vpop.xlane.xlu0 %1598
        %v1600 = vadd.f32 %v1591, %v1592
        %1601 = vadd.xlane.f32.xlu0 %v1600
        %v1602 = vpop.xlane.xlu0 %1601
        %v1603 = vadd.f32 %v1593, %v1594
        %1604 = vadd.xlane.f32.xlu0 %v1603
        %v1605 = vpop.xlane.xlu0 %1604
        %v1606 = vadd.f32 %v1595, %v1596
        %1607 = vadd.xlane.f32.xlu0 %v1606
        %v1608 = vpop.xlane.xlu0 %1607
        %v1609 = vmul.f32 %v1599, 0.00390625
        %v1610 = vmul.f32 %v1602, 0.00390625
        %v1611 = vmul.f32 %v1605, 0.00390625
        %v1612 = vmul.f32 %v1608, 0.00390625
        %v1613 = vmul.f32 %v1609, %v774
        %v1614 = vmul.f32 %v1610, %v775
        %v1615 = vmul.f32 %v1611, %v776
        %v1616 = vmul.f32 %v1612, %v777
        %v1617 = vadd.f32 %v1613, %v1614
        %v1618 = vadd.f32 %v1617, %v1615
        %v1619 = vadd.f32 %v1618, %v1616
        %v1620 = vrot.slane %v1619, 4
        %v1621 = vadd.f32 %v1619, %v1620
        %v1622 = vrot.slane %v1621, 2
        %v1623 = vadd.f32 %v1621, %v1622
        %v1624 = vrot.slane %v1623, 1
        %v1625 = vadd.f32 %v1623, %v1624
        %v1626 = vadd.f32 %v1625, %v778
        %v1627 = vmax.f32 %v1626, 0.0
        %v1628 = vlaneseq
        %v1629 = vshrl.u32 %v1628, 7
        %v1630 = vsub.s32 5, %v1629
        %v1631 = vrot.slane %v764, %v1630
        %v1632 = vlaneseq
        %v1633 = vshrl.u32 %v1632, 7
        %v1634 = vsub.s32 5, %v1633
        %v1635 = vrot.slane %v765, %v1634
        %v1636 = vmul.f32 %v782, %v1631
        %v1637 = vmul.f32 %v782, %v1635
        %v1638 = vmul.f32 %v787, %v1631
        %v1639 = vmul.f32 %v787, %v1635
        %v1640 = vmul.f32 %v792, %v1631
        %v1641 = vmul.f32 %v792, %v1635
        %v1642 = vmul.f32 %v797, %v1631
        %v1643 = vmul.f32 %v797, %v1635
        %v1644 = vlaneseq
        %v1645 = vshrl.u32 %v1644, 7
        %v1646 = vsub.s32 6, %v1645
        %v1647 = vrot.slane %v764, %v1646
        %v1648 = vlaneseq
        %v1649 = vshrl.u32 %v1648, 7
        %v1650 = vsub.s32 6, %v1649
        %v1651 = vrot.slane %v765, %v1650
        %v1652 = vmul.f32 %v817, %v1647
        %v1653 = vmul.f32 %v817, %v1651
        %v1654 = vmul.f32 %v821, %v1647
        %v1655 = vmul.f32 %v821, %v1651
        %v1656 = vmul.f32 %v825, %v1647
        %v1657 = vmul.f32 %v825, %v1651
        %v1658 = vmul.f32 %v829, %v1647
        %v1659 = vmul.f32 %v829, %v1651
        %v1660 = vadd.f32 %v1636, %v1652
        %v1661 = vadd.f32 %v1637, %v1653
        %v1662 = vadd.f32 %v1638, %v1654
        %v1663 = vadd.f32 %v1639, %v1655
        %v1664 = vadd.f32 %v1640, %v1656
        %v1665 = vadd.f32 %v1641, %v1657
        %v1666 = vadd.f32 %v1642, %v1658
        %v1667 = vadd.f32 %v1643, %v1659
        %v1668 = vlaneseq
        %v1669 = vshrl.u32 %v1668, 7
        %v1670 = vsub.s32 7, %v1669
        %v1671 = vrot.slane %v764, %v1670
        %v1672 = vlaneseq
        %v1673 = vshrl.u32 %v1672, 7
        %v1674 = vsub.s32 7, %v1673
        %v1675 = vrot.slane %v765, %v1674
        %v1676 = vmul.f32 %v857, %v1671
        %v1677 = vmul.f32 %v857, %v1675
        %v1678 = vmul.f32 %v861, %v1671
        %v1679 = vmul.f32 %v861, %v1675
        %v1680 = vmul.f32 %v865, %v1671
        %v1681 = vmul.f32 %v865, %v1675
        %v1682 = vmul.f32 %v869, %v1671
        %v1683 = vmul.f32 %v869, %v1675
        %v1684 = vadd.f32 %v1660, %v1676
        %v1685 = vadd.f32 %v1661, %v1677
        %v1686 = vadd.f32 %v1662, %v1678
        %v1687 = vadd.f32 %v1663, %v1679
        %v1688 = vadd.f32 %v1664, %v1680
        %v1689 = vadd.f32 %v1665, %v1681
        %v1690 = vadd.f32 %v1666, %v1682
        %v1691 = vadd.f32 %v1667, %v1683
        %v1692 = vadd.f32 %v1684, %v898
        %v1693 = vadd.f32 %v1685, %v898
        %v1694 = vadd.f32 %v1686, %v903
        %v1695 = vadd.f32 %v1687, %v903
        %v1696 = vadd.f32 %v1688, %v908
        %v1697 = vadd.f32 %v1689, %v908
        %v1698 = vadd.f32 %v1690, %v913
        %v1699 = vadd.f32 %v1691, %v913
        %v1700 = vmax.f32 %v1692, 0.0
        %v1701 = vmax.f32 %v1693, 0.0
        %v1702 = vmax.f32 %v1694, 0.0
        %v1703 = vmax.f32 %v1695, 0.0
        %v1704 = vmax.f32 %v1696, 0.0
        %v1705 = vmax.f32 %v1697, 0.0
        %v1706 = vmax.f32 %v1698, 0.0
        %v1707 = vmax.f32 %v1699, 0.0
        %v1708 = vadd.f32 %v1700, %v1701
        %1709 = vadd.xlane.f32.xlu0 %v1708
        %v1710 = vpop.xlane.xlu0 %1709
        %v1711 = vadd.f32 %v1702, %v1703
        %1712 = vadd.xlane.f32.xlu0 %v1711
        %v1713 = vpop.xlane.xlu0 %1712
        %v1714 = vadd.f32 %v1704, %v1705
        %1715 = vadd.xlane.f32.xlu0 %v1714
        %v1716 = vpop.xlane.xlu0 %1715
        %v1717 = vadd.f32 %v1706, %v1707
        %1718 = vadd.xlane.f32.xlu0 %v1717
        %v1719 = vpop.xlane.xlu0 %1718
        %v1720 = vmul.f32 %v1710, 0.00390625
        %v1721 = vmul.f32 %v1713, 0.00390625
        %v1722 = vmul.f32 %v1716, 0.00390625
        %v1723 = vmul.f32 %v1719, 0.00390625
        %v1724 = vmul.f32 %v1720, %v774
        %v1725 = vmul.f32 %v1721, %v775
        %v1726 = vmul.f32 %v1722, %v776
        %v1727 = vmul.f32 %v1723, %v777
        %v1728 = vadd.f32 %v1724, %v1725
        %v1729 = vadd.f32 %v1728, %v1726
        %v1730 = vadd.f32 %v1729, %v1727
        %v1731 = vrot.slane %v1730, 4
        %v1732 = vadd.f32 %v1730, %v1731
        %v1733 = vrot.slane %v1732, 2
        %v1734 = vadd.f32 %v1732, %v1733
        %v1735 = vrot.slane %v1734, 1
        %v1736 = vadd.f32 %v1734, %v1735
        %v1737 = vadd.f32 %v1736, %v778
        %v1738 = vmax.f32 %v1737, 0.0
        %v1740 = vrot.slane %v1072, 7
        %v1743 = vrot.slane %v1183, 6
        %v1746 = vrot.slane %v1294, 5
        %v1749 = vrot.slane %v1405, 4
        %v1752 = vrot.slane %v1516, 3
        %v1755 = vrot.slane %v1627, 2
        %v1758 = vrot.slane %v1738, 1
        %vm1760 = vcmask 1040384
        %v1761 = vsel %vm1760, %v961, %v1740
        %vm1762 = vcmask 1041408
        %v1763 = vsel %vm1762, %v1761, %v1743
        %vm1764 = vcmask 1042432
        %v1765 = vsel %vm1764, %v1763, %v1746
        %vm1766 = vcmask 1043456
        %v1767 = vsel %vm1766, %v1765, %v1749
        %vm1768 = vcmask 1044480
        %v1769 = vsel %vm1768, %v1767, %v1752
        %vm1770 = vcmask 1045504
        %v1771 = vsel %vm1770, %v1769, %v1755
        %vm1772 = vcmask 1046528
        %v1773 = vsel %vm1772, %v1771, %v1758
        %v1774 = vld [vmem:[%s8] sm:$0x3]
        %v1775 = vlaneseq
        %v1776 = vshrl.u32 %v1775, 7
        %v1777 = vsub.s32 0, %v1776
        %v1778 = vrot.slane %v1774, %v1777
        %v1779 = vmul.f32 %v1773, %v1778
        %1780 = vadd.xlane.f32.xlu0 %v1779
        %v1781 = vpop.xlane.xlu0 %1780
        %v1782 = vlaneseq
        %v1783 = vshrl.u32 %v1782, 7
        %v1784 = vsub.s32 1, %v1783
        %v1785 = vrot.slane %v1774, %v1784
        %v1786 = vmul.f32 %v1773, %v1785
        %1787 = vadd.xlane.f32.xlu0 %v1786
        %v1788 = vpop.xlane.xlu0 %1787
        %vm1789 = vcmask 7168
        %v1790 = vsel %vm1789, %v1781, %v1788
        %v1791 = vld [vmem:[%s9] sm:$0x1]
        %v1793 = vlaneseq
        %v1794 = vshrl.u32 %v1793, 7
        %v1795 = vsub.s32 0, %v1794
        %v1796 = vrot.slane %v1791, %v1795
        %v1798 = vadd.f32 %v1790, %v1796
        %vm1799 = vcmask 15360
        %1800 = vst.msk [vmem:[%s375] sm:$0xff] %vm1799, %v1798
        %p1801 = scmp.lt.s32.totalorder %s22, 1
        %s1802 = scalar_select %p1801, %s22, 1
        %s1803 = smul.addr %s1802, 8
        %s1804 = scalar_lea.vmem %s10, %s1803
        // Predicated region
        $region65: #{tpu_custom_call.1} parent=59 // pred_check
          %p1805 = pneg %p255
        $region66: #{tpu_custom_call.1} parent=59 // pred_check_branch
          %1807 = sbr.rel (%p1805) target = $region68
        $region67: #{tpu_custom_call.1} parent=59 // pred_region
          _
        $region68: #{tpu_custom_call.1} parent=59 // pred_fallthru
          _
      $region60: #{tpu_custom_call.1} parent=5 // pred_fallthru
        _
      %p1808 = scmp.le.s32.totalorder 2, %s17
      // Predicated region
      $region69: #{tpu_custom_call.1} parent=5 // pred_check
        %p1809 = pneg %p1808
      $region70: #{tpu_custom_call.1} parent=5 // pred_check_branch
        %1811 = sbr.rel (%p1809) target = $region72
      $region71: #{tpu_custom_call.1} parent=5 // pred_region
        %s1812 = ssub.s32 %s17, 2
        // Predicated region
        $region73: #{tpu_custom_call.1} parent=71 // pred_check
          %p1813 = pneg %p261
        $region74: #{tpu_custom_call.1} parent=71 // pred_check_branch
          %1815 = sbr.rel (%p1813) target = $region76
        $region75: #{tpu_custom_call.1} parent=71 // pred_region
          %p1816 = scmp.lt.s32.totalorder %s23, 1
          %s1817 = scalar_select %p1816, %s23, 1
          %s1818 = smul.addr %s1817, 8
          %s1819 = scalar_lea.vmem %s10, %s1818
        $region76: #{tpu_custom_call.1} parent=71 // pred_fallthru
          _
      $region72: #{tpu_custom_call.1} parent=5 // pred_fallthru
        _
    $region6: #{tpu_custom_call.1} parent=1 // loop_footer
      %s21 = sadd.s32 1, %s17
    $region7: #{tpu_custom_call.1} parent=1 // loop_footer_branch
      %16 = sbr.rel target = $region3
    $region8: #{tpu_custom_call.1} parent=1 // loop_exit
      _
    %1820 = vsyncpa [#allocation3], 1
    %s1821 = scalar_lea.sflag [#allocation3], 1
    %1822 = vsyncpa %s1821, 1

</llo_original>
